<compile_context>
chip_gen: v7x
topology: tpu7x:2x2x1
jax: 0.10.0
libtpu: 0.0.40
codegen_flags: <defaults>
</compile_context>

<pallas_src>
import jax
import jax.numpy as jnp
from jax.experimental import pallas as pl
from jax.experimental.pallas import tpu as pltpu


# ---------------- Pallas kernel (fully fused, one batch tile per grid step) ----------------

def _fused_net_kernel(p_ref, wt_ref, cb_ref, fcw_ref, fcb_ref, o_ref):
    """Fused conv3x3(+bias,ReLU) -> flatten -> linear for one batch tile.

    p_ref  : (1, C*9, BT*H*W)      im2col patches, batch folded into lanes, f32
    wt_ref : (c_out, C*9)          conv weight (PyTorch (ci,kh,kw) flatten), f32
    cb_ref : (c_out, 1)            conv bias, f32
    fcw_ref: (c_out, H*W, CLS_PAD) permuted + class-padded FC weight, f32
    fcb_ref: (1, CLS_PAD)          class-padded FC bias, f32
    o_ref  : (1, BT, CLS_PAD)      padded logits for this batch tile
    """
    c_out, hw, _ = fcw_ref.shape
    bt = o_ref.shape[1]

    # Conv for the whole batch tile as a single lane-dense MXU matmul.
    # act[c, b*HW + s] is exactly torch.flatten(NCHW) order within each sample chunk.
    act = jnp.dot(wt_ref[...], p_ref[0],
                  preferred_element_type=jnp.float32)            # (c_out, BT*HW)
    act = jnp.maximum(act + cb_ref[...], 0.0)                    # bias + ReLU in f32

    # Final Linear per sample: logits[k] = fc_b[k] + sum_{c,s} act[c, b*HW+s] * fcw[c, s, k].
    # Static unrolled loops (BT, c_out small): each step is a (1, H*W) @ (H*W, CLS_PAD)
    # MXU matmul accumulated in f32. The 128-wide padded class dim keeps the MXU
    # output lanes and the store path dense.
    rows = []
    for b in range(bt):
        acc = fcb_ref[...]                                       # (1, CLS_PAD)
        for c in range(c_out):
            acc = acc + jnp.dot(act[c:c + 1, b * hw:(b + 1) * hw], fcw_ref[c],
                                preferred_element_type=jnp.float32)
        rows.append(acc)
    o_ref[0] = jnp.concatenate(rows, axis=0).astype(o_ref.dtype)  # (BT, CLS_PAD), one dense store


# ---------------- JAX glue (trace-time im2col + weight permutation) ----------------

@jax.jit
def forward(x_nchw, conv_w, conv_b, fc_w, fc_b):
    """BasicModelWrapper.forward(x): conv3x3(pad=1)+ReLU -> flatten(NCHW) -> linear."""
    N, C, H, W = x_nchw.shape
    c_out = conv_w.shape[0]
    num_classes = fc_w.shape[0]
    HW = H * W
    K1 = C * 9
    cls_pad = max(128, -(-num_classes // 128) * 128)

    # Batch tiling: up to 8 samples per grid step; pad the batch to a full tile.
    BT = min(8, N)
    T = -(-N // BT)
    N_pad = T * BT

    # im2col at trace time, row order (ci, kh, kw) to match PyTorch Conv2d weight flattening.
    xp = jnp.pad(x_nchw, ((0, N_pad - N), (0, 0), (1, 1), (1, 1)))
    cols = jnp.stack(
        [xp[:, :, i:i + H, j:j + W] for i in range(3) for j in range(3)],
        axis=2)                                                  # (N_pad, C, 9, H, W)
    patches = cols.reshape(N_pad, K1, HW)                        # (N_pad, C*9, H*W)
    # Fold the batch tile into the lane dim: block[t][k, b*HW + s] = patches[t*BT + b, k, s].
    patches_wide = (patches.reshape(T, BT, K1, HW)
                    .transpose(0, 2, 1, 3)
                    .reshape(T, K1, BT * HW))                    # (T, C*9, BT*H*W)

    w_t = conv_w.reshape(c_out, K1)                              # (c_out, C*9)
    cb = conv_b.reshape(c_out, 1)

    # Weight-side permutation (trace time, no per-step activation transpose):
    # fcw_p[c, s, k] = fc_w[k, c*H*W + s]; pad classes up to 128 lanes with zeros.
    fcw_p = fc_w.reshape(num_classes, c_out, HW).transpose(1, 2, 0)
    fcw_p = jnp.pad(fcw_p, ((0, 0), (0, 0), (0, cls_pad - num_classes)))
    fcb_p = jnp.pad(fc_b, (0, cls_pad - num_classes)).reshape(1, cls_pad)

    out = pl.pallas_call(
        _fused_net_kernel,
        out_shape=jax.ShapeDtypeStruct((T, BT, cls_pad), jnp.float32),
        grid=(T,),
        in_specs=[
            pl.BlockSpec((1, K1, BT * HW), lambda t: (t, 0, 0)),       # patches (per tile)
            pl.BlockSpec((c_out, K1), lambda t: (0, 0)),               # conv weight
            pl.BlockSpec((c_out, 1), lambda t: (0, 0)),                # conv bias
            pl.BlockSpec((c_out, HW, cls_pad), lambda t: (0, 0, 0)),   # fc weight
            pl.BlockSpec((1, cls_pad), lambda t: (0, 0)),              # fc bias
        ],
        out_specs=pl.BlockSpec((1, BT, cls_pad), lambda t: (t, 0, 0)),
        compiler_params=pltpu.CompilerParams(
            dimension_semantics=("parallel",)),                  # v7x: 2 TCs split batch tiles
    )(patches_wide, w_t, cb, fcw_p, fcb_p)

    return out.reshape(N_pad, cls_pad)[:N, :num_classes]


# ---------------- params, reference, main ----------------

def init_params(key, c_in, c_out, h, w, num_classes):
    k1, k2, k3, k4 = jax.random.split(key, 4)
    conv_w = jax.random.normal(k1, (c_out, c_in, 3, 3), jnp.float32) * (1.0 / (c_in * 9)) ** 0.5
    conv_b = jax.random.normal(k2, (c_out,), jnp.float32) * 0.01
    fc_in = c_out * h * w
    fc_w = jax.random.normal(k3, (num_classes, fc_in), jnp.float32) * (1.0 / fc_in) ** 0.5
    fc_b = jax.random.normal(k4, (num_classes,), jnp.float32) * 0.01
    return conv_w, conv_b, fc_w, fc_b


def reference_forward(x_nchw, conv_w, conv_b, fc_w, fc_b):
    """Pure-JAX reference (independent of the kernel's data layout)."""
    y = jax.lax.conv_general_dilated(
        x_nchw, conv_w, window_strides=(1, 1), padding="SAME",
        dimension_numbers=("NCHW", "OIHW", "NCHW"),
        precision=jax.lax.Precision.HIGHEST)
    y = jnp.maximum(y + conv_b[None, :, None, None], 0.0)
    flat = y.reshape(y.shape[0], -1)                             # torch.flatten(x, 1) on NCHW
    return jnp.dot(flat, fc_w.T, precision=jax.lax.Precision.HIGHEST) + fc_b


if __name__ == "__main__":
    key = jax.random.PRNGKey(0)
    kx, kp = jax.random.split(key)

    N, C, H, W = 2, 4, 16, 16
    C_OUT, NUM_CLASSES = 8, 10

    # Input within the wrapper's data range [data_min, data_max] = [0, 1].
    x = jax.random.uniform(kx, (N, C, H, W), jnp.float32, minval=0.0, maxval=1.0)
    conv_w, conv_b, fc_w, fc_b = init_params(kp, C, C_OUT, H, W, NUM_CLASSES)

    logits = forward(x, conv_w, conv_b, fc_w, fc_b)
    logits = jax.block_until_ready(logits)

    ref = reference_forward(x, conv_w, conv_b, fc_w, fc_b)

    assert logits.shape == (N, NUM_CLASSES)
    assert logits.dtype == jnp.float32
    assert bool(jnp.all(jnp.isfinite(logits)))
    max_err = float(jnp.max(jnp.abs(logits - ref)))
    assert max_err < 5e-3, f"mismatch vs reference: {max_err}"
    print("KERNEL_OK")
</pallas_src>

<mosaic_0001>
module attributes {stable_mosaic.version = 11 : i64} {
  func.func @_fused_net_kernel(%arg0: i32, %arg1: memref<1x36x512xf32, #tpu.memory_space<vmem>>, %arg2: memref<8x36xf32, #tpu.memory_space<vmem>>, %arg3: memref<8x1xf32, #tpu.memory_space<vmem>>, %arg4: memref<8x256x128xf32, #tpu.memory_space<vmem>>, %arg5: memref<1x128xf32, #tpu.memory_space<vmem>>, %arg6: memref<1x2x128xf32, #tpu.memory_space<vmem>>) attributes {dimension_semantics = [#tpu.dimension_semantics<parallel>], iteration_bounds = array<i64: 1>, scalar_prefetch = 0 : i64, scratch_operands = 0 : i64, tpu.core_type = #tpu.core_type<tc>, window_params = [{transform_indices = @transform_0, window_bounds = array<i64: 1, 36, 512>}, {pipeline_mode = #tpu.pipeline_mode<synchronous>, transform_indices = @transform_1, window_bounds = array<i64: 8, 36>}, {pipeline_mode = #tpu.pipeline_mode<synchronous>, transform_indices = @transform_2, window_bounds = array<i64: 8, 1>}, {pipeline_mode = #tpu.pipeline_mode<synchronous>, transform_indices = @transform_3, window_bounds = array<i64: 8, 256, 128>}, {pipeline_mode = #tpu.pipeline_mode<synchronous>, transform_indices = @transform_4, window_bounds = array<i64: 1, 128>}, {transform_indices = @transform_5, window_bounds = array<i64: 1, 2, 128>}]} {
    %c0 = arith.constant 0 : index
    %c0_0 = arith.constant 0 : index
    %0 = vector.load %arg2[%c0, %c0_0] : memref<8x36xf32, #tpu.memory_space<vmem>>, vector<8x36xf32>
    %c0_1 = arith.constant 0 : index
    %c0_2 = arith.constant 0 : index
    %c0_3 = arith.constant 0 : index
    %1 = vector.load %arg1[%c0_1, %c0_2, %c0_3] : memref<1x36x512xf32, #tpu.memory_space<vmem>>, vector<1x36x512xf32>
    %2 = vector.shape_cast %1 : vector<1x36x512xf32> to vector<36x512xf32>
    %cst = arith.constant dense<0.000000e+00> : vector<8x512xf32>
    %3 = tpu.matmul %0, %2, %cst {dimension_numbers = #tpu.dot_dimension_numbers<[1], [0], [0], [1], [0, 0, 1, 1], [], []>} : vector<8x36xf32>, vector<36x512xf32>, vector<8x512xf32> -> vector<8x512xf32>
    %c0_4 = arith.constant 0 : index
    %c0_5 = arith.constant 0 : index
    %4 = vector.load %arg3[%c0_4, %c0_5] : memref<8x1xf32, #tpu.memory_space<vmem>>, vector<8x1xf32>
    %5 = vector.broadcast %4 : vector<8x1xf32> to vector<8x512xf32>
    %6 = arith.addf %3, %5 : vector<8x512xf32>
    %cst_6 = arith.constant 0.000000e+00 : f32
    %7 = vector.broadcast %cst_6 : f32 to vector<8x512xf32>
    %8 = arith.maximumf %6, %7 : vector<8x512xf32>
    %c0_7 = arith.constant 0 : index
    %c0_8 = arith.constant 0 : index
    %9 = vector.load %arg5[%c0_7, %c0_8] : memref<1x128xf32, #tpu.memory_space<vmem>>, vector<1x128xf32>
    %10 = vector.extract_strided_slice %8 {offsets = [0, 0], sizes = [1, 256], strides = [1, 1]} : vector<8x512xf32> to vector<1x256xf32>
    %c0_9 = arith.constant 0 : index
    %c0_10 = arith.constant 0 : index
    %c0_11 = arith.constant 0 : index
    %11 = vector.load %arg4[%c0_9, %c0_10, %c0_11] : memref<8x256x128xf32, #tpu.memory_space<vmem>>, vector<1x256x128xf32>
    %12 = vector.shape_cast %11 : vector<1x256x128xf32> to vector<256x128xf32>
    %cst_12 = arith.constant dense<0.000000e+00> : vector<1x128xf32>
    %13 = tpu.matmul %10, %12, %cst_12 {dimension_numbers = #tpu.dot_dimension_numbers<[1], [0], [0], [1], [0, 0, 1, 1], [], []>} : vector<1x256xf32>, vector<256x128xf32>, vector<1x128xf32> -> vector<1x128xf32>
    %14 = arith.addf %9, %13 : vector<1x128xf32>
    %15 = vector.extract_strided_slice %8 {offsets = [1, 0], sizes = [1, 256], strides = [1, 1]} : vector<8x512xf32> to vector<1x256xf32>
    %c1 = arith.constant 1 : index
    %c0_13 = arith.constant 0 : index
    %c0_14 = arith.constant 0 : index
    %16 = vector.load %arg4[%c1, %c0_13, %c0_14] : memref<8x256x128xf32, #tpu.memory_space<vmem>>, vector<1x256x128xf32>
    %17 = vector.shape_cast %16 : vector<1x256x128xf32> to vector<256x128xf32>
    %cst_15 = arith.constant dense<0.000000e+00> : vector<1x128xf32>
    %18 = tpu.matmul %15, %17, %cst_15 {dimension_numbers = #tpu.dot_dimension_numbers<[1], [0], [0], [1], [0, 0, 1, 1], [], []>} : vector<1x256xf32>, vector<256x128xf32>, vector<1x128xf32> -> vector<1x128xf32>
    %19 = arith.addf %14, %18 : vector<1x128xf32>
    %20 = vector.extract_strided_slice %8 {offsets = [2, 0], sizes = [1, 256], strides = [1, 1]} : vector<8x512xf32> to vector<1x256xf32>
    %c2 = arith.constant 2 : index
    %c0_16 = arith.constant 0 : index
    %c0_17 = arith.constant 0 : index
    %21 = vector.load %arg4[%c2, %c0_16, %c0_17] : memref<8x256x128xf32, #tpu.memory_space<vmem>>, vector<1x256x128xf32>
    %22 = vector.shape_cast %21 : vector<1x256x128xf32> to vector<256x128xf32>
    %cst_18 = arith.constant dense<0.000000e+00> : vector<1x128xf32>
    %23 = tpu.matmul %20, %22, %cst_18 {dimension_numbers = #tpu.dot_dimension_numbers<[1], [0], [0], [1], [0, 0, 1, 1], [], []>} : vector<1x256xf32>, vector<256x128xf32>, vector<1x128xf32> -> vector<1x128xf32>
    %24 = arith.addf %19, %23 : vector<1x128xf32>
    %25 = vector.extract_strided_slice %8 {offsets = [3, 0], sizes = [1, 256], strides = [1, 1]} : vector<8x512xf32> to vector<1x256xf32>
    %c3 = arith.constant 3 : index
    %c0_19 = arith.constant 0 : index
    %c0_20 = arith.constant 0 : index
    %26 = vector.load %arg4[%c3, %c0_19, %c0_20] : memref<8x256x128xf32, #tpu.memory_space<vmem>>, vector<1x256x128xf32>
    %27 = vector.shape_cast %26 : vector<1x256x128xf32> to vector<256x128xf32>
    %cst_21 = arith.constant dense<0.000000e+00> : vector<1x128xf32>
    %28 = tpu.matmul %25, %27, %cst_21 {dimension_numbers = #tpu.dot_dimension_numbers<[1], [0], [0], [1], [0, 0, 1, 1], [], []>} : vector<1x256xf32>, vector<256x128xf32>, vector<1x128xf32> -> vector<1x128xf32>
    %29 = arith.addf %24, %28 : vector<1x128xf32>
    %30 = vector.extract_strided_slice %8 {offsets = [4, 0], sizes = [1, 256], strides = [1, 1]} : vector<8x512xf32> to vector<1x256xf32>
    %c4 = arith.constant 4 : index
    %c0_22 = arith.constant 0 : index
    %c0_23 = arith.constant 0 : index
    %31 = vector.load %arg4[%c4, %c0_22, %c0_23] : memref<8x256x128xf32, #tpu.memory_space<vmem>>, vector<1x256x128xf32>
    %32 = vector.shape_cast %31 : vector<1x256x128xf32> to vector<256x128xf32>
    %cst_24 = arith.constant dense<0.000000e+00> : vector<1x128xf32>
    %33 = tpu.matmul %30, %32, %cst_24 {dimension_numbers = #tpu.dot_dimension_numbers<[1], [0], [0], [1], [0, 0, 1, 1], [], []>} : vector<1x256xf32>, vector<256x128xf32>, vector<1x128xf32> -> vector<1x128xf32>
    %34 = arith.addf %29, %33 : vector<1x128xf32>
    %35 = vector.extract_strided_slice %8 {offsets = [5, 0], sizes = [1, 256], strides = [1, 1]} : vector<8x512xf32> to vector<1x256xf32>
    %c5 = arith.constant 5 : index
    %c0_25 = arith.constant 0 : index
    %c0_26 = arith.constant 0 : index
    %36 = vector.load %arg4[%c5, %c0_25, %c0_26] : memref<8x256x128xf32, #tpu.memory_space<vmem>>, vector<1x256x128xf32>
    %37 = vector.shape_cast %36 : vector<1x256x128xf32> to vector<256x128xf32>
    %cst_27 = arith.constant dense<0.000000e+00> : vector<1x128xf32>
    %38 = tpu.matmul %35, %37, %cst_27 {dimension_numbers = #tpu.dot_dimension_numbers<[1], [0], [0], [1], [0, 0, 1, 1], [], []>} : vector<1x256xf32>, vector<256x128xf32>, vector<1x128xf32> -> vector<1x128xf32>
    %39 = arith.addf %34, %38 : vector<1x128xf32>
    %40 = vector.extract_strided_slice %8 {offsets = [6, 0], sizes = [1, 256], strides = [1, 1]} : vector<8x512xf32> to vector<1x256xf32>
    %c6 = arith.constant 6 : index
    %c0_28 = arith.constant 0 : index
    %c0_29 = arith.constant 0 : index
    %41 = vector.load %arg4[%c6, %c0_28, %c0_29] : memref<8x256x128xf32, #tpu.memory_space<vmem>>, vector<1x256x128xf32>
    %42 = vector.shape_cast %41 : vector<1x256x128xf32> to vector<256x128xf32>
    %cst_30 = arith.constant dense<0.000000e+00> : vector<1x128xf32>
    %43 = tpu.matmul %40, %42, %cst_30 {dimension_numbers = #tpu.dot_dimension_numbers<[1], [0], [0], [1], [0, 0, 1, 1], [], []>} : vector<1x256xf32>, vector<256x128xf32>, vector<1x128xf32> -> vector<1x128xf32>
    %44 = arith.addf %39, %43 : vector<1x128xf32>
    %45 = vector.extract_strided_slice %8 {offsets = [7, 0], sizes = [1, 256], strides = [1, 1]} : vector<8x512xf32> to vector<1x256xf32>
    %c7 = arith.constant 7 : index
    %c0_31 = arith.constant 0 : index
    %c0_32 = arith.constant 0 : index
    %46 = vector.load %arg4[%c7, %c0_31, %c0_32] : memref<8x256x128xf32, #tpu.memory_space<vmem>>, vector<1x256x128xf32>
    %47 = vector.shape_cast %46 : vector<1x256x128xf32> to vector<256x128xf32>
    %cst_33 = arith.constant dense<0.000000e+00> : vector<1x128xf32>
    %48 = tpu.matmul %45, %47, %cst_33 {dimension_numbers = #tpu.dot_dimension_numbers<[1], [0], [0], [1], [0, 0, 1, 1], [], []>} : vector<1x256xf32>, vector<256x128xf32>, vector<1x128xf32> -> vector<1x128xf32>
    %49 = arith.addf %44, %48 : vector<1x128xf32>
    %c0_34 = arith.constant 0 : index
    %c0_35 = arith.constant 0 : index
    %50 = vector.load %arg5[%c0_34, %c0_35] : memref<1x128xf32, #tpu.memory_space<vmem>>, vector<1x128xf32>
    %51 = vector.extract_strided_slice %8 {offsets = [0, 256], sizes = [1, 256], strides = [1, 1]} : vector<8x512xf32> to vector<1x256xf32>
    %c0_36 = arith.constant 0 : index
    %c0_37 = arith.constant 0 : index
    %c0_38 = arith.constant 0 : index
    %52 = vector.load %arg4[%c0_36, %c0_37, %c0_38] : memref<8x256x128xf32, #tpu.memory_space<vmem>>, vector<1x256x128xf32>
    %53 = vector.shape_cast %52 : vector<1x256x128xf32> to vector<256x128xf32>
    %cst_39 = arith.constant dense<0.000000e+00> : vector<1x128xf32>
    %54 = tpu.matmul %51, %53, %cst_39 {dimension_numbers = #tpu.dot_dimension_numbers<[1], [0], [0], [1], [0, 0, 1, 1], [], []>} : vector<1x256xf32>, vector<256x128xf32>, vector<1x128xf32> -> vector<1x128xf32>
    %55 = arith.addf %50, %54 : vector<1x128xf32>
    %56 = vector.extract_strided_slice %8 {offsets = [1, 256], sizes = [1, 256], strides = [1, 1]} : vector<8x512xf32> to vector<1x256xf32>
    %c1_40 = arith.constant 1 : index
    %c0_41 = arith.constant 0 : index
    %c0_42 = arith.constant 0 : index
    %57 = vector.load %arg4[%c1_40, %c0_41, %c0_42] : memref<8x256x128xf32, #tpu.memory_space<vmem>>, vector<1x256x128xf32>
    %58 = vector.shape_cast %57 : vector<1x256x128xf32> to vector<256x128xf32>
    %cst_43 = arith.constant dense<0.000000e+00> : vector<1x128xf32>
    %59 = tpu.matmul %56, %58, %cst_43 {dimension_numbers = #tpu.dot_dimension_numbers<[1], [0], [0], [1], [0, 0, 1, 1], [], []>} : vector<1x256xf32>, vector<256x128xf32>, vector<1x128xf32> -> vector<1x128xf32>
    %60 = arith.addf %55, %59 : vector<1x128xf32>
    %61 = vector.extract_strided_slice %8 {offsets = [2, 256], sizes = [1, 256], strides = [1, 1]} : vector<8x512xf32> to vector<1x256xf32>
    %c2_44 = arith.constant 2 : index
    %c0_45 = arith.constant 0 : index
    %c0_46 = arith.constant 0 : index
    %62 = vector.load %arg4[%c2_44, %c0_45, %c0_46] : memref<8x256x128xf32, #tpu.memory_space<vmem>>, vector<1x256x128xf32>
    %63 = vector.shape_cast %62 : vector<1x256x128xf32> to vector<256x128xf32>
    %cst_47 = arith.constant dense<0.000000e+00> : vector<1x128xf32>
    %64 = tpu.matmul %61, %63, %cst_47 {dimension_numbers = #tpu.dot_dimension_numbers<[1], [0], [0], [1], [0, 0, 1, 1], [], []>} : vector<1x256xf32>, vector<256x128xf32>, vector<1x128xf32> -> vector<1x128xf32>
    %65 = arith.addf %60, %64 : vector<1x128xf32>
    %66 = vector.extract_strided_slice %8 {offsets = [3, 256], sizes = [1, 256], strides = [1, 1]} : vector<8x512xf32> to vector<1x256xf32>
    %c3_48 = arith.constant 3 : index
    %c0_49 = arith.constant 0 : index
    %c0_50 = arith.constant 0 : index
    %67 = vector.load %arg4[%c3_48, %c0_49, %c0_50] : memref<8x256x128xf32, #tpu.memory_space<vmem>>, vector<1x256x128xf32>
    %68 = vector.shape_cast %67 : vector<1x256x128xf32> to vector<256x128xf32>
    %cst_51 = arith.constant dense<0.000000e+00> : vector<1x128xf32>
    %69 = tpu.matmul %66, %68, %cst_51 {dimension_numbers = #tpu.dot_dimension_numbers<[1], [0], [0], [1], [0, 0, 1, 1], [], []>} : vector<1x256xf32>, vector<256x128xf32>, vector<1x128xf32> -> vector<1x128xf32>
    %70 = arith.addf %65, %69 : vector<1x128xf32>
    %71 = vector.extract_strided_slice %8 {offsets = [4, 256], sizes = [1, 256], strides = [1, 1]} : vector<8x512xf32> to vector<1x256xf32>
    %c4_52 = arith.constant 4 : index
    %c0_53 = arith.constant 0 : index
    %c0_54 = arith.constant 0 : index
    %72 = vector.load %arg4[%c4_52, %c0_53, %c0_54] : memref<8x256x128xf32, #tpu.memory_space<vmem>>, vector<1x256x128xf32>
    %73 = vector.shape_cast %72 : vector<1x256x128xf32> to vector<256x128xf32>
    %cst_55 = arith.constant dense<0.000000e+00> : vector<1x128xf32>
    %74 = tpu.matmul %71, %73, %cst_55 {dimension_numbers = #tpu.dot_dimension_numbers<[1], [0], [0], [1], [0, 0, 1, 1], [], []>} : vector<1x256xf32>, vector<256x128xf32>, vector<1x128xf32> -> vector<1x128xf32>
    %75 = arith.addf %70, %74 : vector<1x128xf32>
    %76 = vector.extract_strided_slice %8 {offsets = [5, 256], sizes = [1, 256], strides = [1, 1]} : vector<8x512xf32> to vector<1x256xf32>
    %c5_56 = arith.constant 5 : index
    %c0_57 = arith.constant 0 : index
    %c0_58 = arith.constant 0 : index
    %77 = vector.load %arg4[%c5_56, %c0_57, %c0_58] : memref<8x256x128xf32, #tpu.memory_space<vmem>>, vector<1x256x128xf32>
    %78 = vector.shape_cast %77 : vector<1x256x128xf32> to vector<256x128xf32>
    %cst_59 = arith.constant dense<0.000000e+00> : vector<1x128xf32>
    %79 = tpu.matmul %76, %78, %cst_59 {dimension_numbers = #tpu.dot_dimension_numbers<[1], [0], [0], [1], [0, 0, 1, 1], [], []>} : vector<1x256xf32>, vector<256x128xf32>, vector<1x128xf32> -> vector<1x128xf32>
    %80 = arith.addf %75, %79 : vector<1x128xf32>
    %81 = vector.extract_strided_slice %8 {offsets = [6, 256], sizes = [1, 256], strides = [1, 1]} : vector<8x512xf32> to vector<1x256xf32>
    %c6_60 = arith.constant 6 : index
    %c0_61 = arith.constant 0 : index
    %c0_62 = arith.constant 0 : index
    %82 = vector.load %arg4[%c6_60, %c0_61, %c0_62] : memref<8x256x128xf32, #tpu.memory_space<vmem>>, vector<1x256x128xf32>
    %83 = vector.shape_cast %82 : vector<1x256x128xf32> to vector<256x128xf32>
    %cst_63 = arith.constant dense<0.000000e+00> : vector<1x128xf32>
    %84 = tpu.matmul %81, %83, %cst_63 {dimension_numbers = #tpu.dot_dimension_numbers<[1], [0], [0], [1], [0, 0, 1, 1], [], []>} : vector<1x256xf32>, vector<256x128xf32>, vector<1x128xf32> -> vector<1x128xf32>
    %85 = arith.addf %80, %84 : vector<1x128xf32>
    %86 = vector.extract_strided_slice %8 {offsets = [7, 256], sizes = [1, 256], strides = [1, 1]} : vector<8x512xf32> to vector<1x256xf32>
    %c7_64 = arith.constant 7 : index
    %c0_65 = arith.constant 0 : index
    %c0_66 = arith.constant 0 : index
    %87 = vector.load %arg4[%c7_64, %c0_65, %c0_66] : memref<8x256x128xf32, #tpu.memory_space<vmem>>, vector<1x256x128xf32>
    %88 = vector.shape_cast %87 : vector<1x256x128xf32> to vector<256x128xf32>
    %cst_67 = arith.constant dense<0.000000e+00> : vector<1x128xf32>
    %89 = tpu.matmul %86, %88, %cst_67 {dimension_numbers = #tpu.dot_dimension_numbers<[1], [0], [0], [1], [0, 0, 1, 1], [], []>} : vector<1x256xf32>, vector<256x128xf32>, vector<1x128xf32> -> vector<1x128xf32>
    %90 = arith.addf %85, %89 : vector<1x128xf32>
    %91 = tpu.concatenate %49, %90 in 0 : vector<1x128xf32>, vector<1x128xf32> -> vector<2x128xf32>
    %c0_68 = arith.constant 0 : index
    %c0_69 = arith.constant 0 : index
    %c0_70 = arith.constant 0 : index
    %92 = vector.load %arg6[%c0_68, %c0_69, %c0_70] : memref<1x2x128xf32, #tpu.memory_space<vmem>>, vector<1x2x128xf32>
    %93 = vector.shape_cast %92 : vector<1x2x128xf32> to vector<2x128xf32>
    %94 = vector.shape_cast %91 : vector<2x128xf32> to vector<1x2x128xf32>
    tpu.vector_store %arg6[%c0_68, %c0_69, %c0_70], %94 {strides = array<i32>} : memref<1x2x128xf32, #tpu.memory_space<vmem>>, vector<1x2x128xf32>,
    return
  }
  func.func @transform_0(%arg0: i32) -> (i32, i32, i32) {
    %c0_i32 = arith.constant 0 : i32
    %c0_i32_0 = arith.constant 0 : i32
    %c0_i32_1 = arith.constant 0 : i32
    return %arg0, %c0_i32, %c0_i32_0 : i32, i32, i32
  }
  func.func @transform_1(%arg0: i32) -> (i32, i32) {
    %c0_i32 = arith.constant 0 : i32
    %c0_i32_0 = arith.constant 0 : i32
    %c0_i32_1 = arith.constant 0 : i32
    return %c0_i32, %c0_i32_0 : i32, i32
  }
  func.func @transform_2(%arg0: i32) -> (i32, i32) {
    %c0_i32 = arith.constant 0 : i32
    %c0_i32_0 = arith.constant 0 : i32
    %c0_i32_1 = arith.constant 0 : i32
    return %c0_i32, %c0_i32_0 : i32, i32
  }
  func.func @transform_3(%arg0: i32) -> (i32, i32, i32) {
    %c0_i32 = arith.constant 0 : i32
    %c0_i32_0 = arith.constant 0 : i32
    %c0_i32_1 = arith.constant 0 : i32
    %c0_i32_2 = arith.constant 0 : i32
    return %c0_i32, %c0_i32_0, %c0_i32_1 : i32, i32, i32
  }
  func.func @transform_4(%arg0: i32) -> (i32, i32) {
    %c0_i32 = arith.constant 0 : i32
    %c0_i32_0 = arith.constant 0 : i32
    %c0_i32_1 = arith.constant 0 : i32
    return %c0_i32, %c0_i32_0 : i32, i32
  }
  func.func @transform_5(%arg0: i32) -> (i32, i32, i32) {
    %c0_i32 = arith.constant 0 : i32
    %c0_i32_0 = arith.constant 0 : i32
    %c0_i32_1 = arith.constant 0 : i32
    return %arg0, %c0_i32, %c0_i32_0 : i32, i32, i32
  }
}

</mosaic_0001>

<llo_original>
// kernel: forward.1
$region0: #{forward.1}
  #allocation0 [shape = 'u32[]', space=smem, size = 0x4, offset = 0x4, fixed_abs, tag = 'smem constant byte address 0x4 - core index']
  #allocation1 [shape = 'u32[144,128]{1,0:T(1,128)}', space=vmem, size = 0x12000, scoped, tag = 'internal scratch']
  %s0 = inlined_call_operand.vmem [shape: f32[1,36,512], index: 0, kind: input, shape index: {}]
  %s1 = inlined_call_operand.vmem [shape: f32[8,36], index: 1, kind: input, shape index: {}]
  %s2 = inlined_call_operand.vmem [shape: f32[8,1], index: 2, kind: input, shape index: {}]
  %s3 = inlined_call_operand.vmem [shape: f32[8,256,128], index: 3, kind: input, shape index: {}]
  %s4 = inlined_call_operand.vmem [shape: f32[1,128], index: 4, kind: input, shape index: {}]
  %s5 = inlined_call_operand.hbm [shape: f32[1,2,128], index: 5, kind: output, shape index: {}]
  %s6 = sld [smem:[#allocation0]]
  $region30: #{forward.1} parent=0
    _
  %s8 = ssub.s32 1, %s6
  %s9 = scalar_select 0, %s8, %s6
  $region1: #{forward.1} parent=0
    #allocation2 [shape = 'u8[1024]{0}', space=vmem, size = 0x400, scoped, tag = 'output window, operand 0, single buffered']
    #allocation3 [shape = 's32[1]{0}', space=sflag, size = 0x4, scoped, tag = 'scoped memory for forward.1']
    %10 = vsyncpa [#allocation3], 0
    // Predicated region
    $region2: #{forward.1} parent=1 // pred_check
      _
    $region3: #{forward.1} parent=1 // pred_check_branch
      %12 = sbr.rel (0) target = $region5
    $region4: #{forward.1} parent=1 // pred_region
      _
    $region5: #{forward.1} parent=1 // pred_fallthru
      _
    // Predicated region
    $region6: #{forward.1} parent=1 // pred_check
      _
    $region7: #{forward.1} parent=1 // pred_check_branch
      %14 = sbr.rel (0) target = $region9
    $region8: #{forward.1} parent=1 // pred_region
      _
    $region9: #{forward.1} parent=1 // pred_fallthru
      _
    // Predicated region
    $region10: #{forward.1} parent=1 // pred_check
      _
    $region11: #{forward.1} parent=1 // pred_check_branch
      %16 = sbr.rel (0) target = $region13
    $region12: #{forward.1} parent=1 // pred_region
      _
    $region13: #{forward.1} parent=1 // pred_fallthru
      _
    // Predicated region
    $region14: #{forward.1} parent=1 // pred_check
      _
    $region15: #{forward.1} parent=1 // pred_check_branch
      %18 = sbr.rel (0) target = $region17
    $region16: #{forward.1} parent=1 // pred_region
      _
    $region17: #{forward.1} parent=1 // pred_fallthru
      _
    // Predicated region
    $region18: #{forward.1} parent=1 // pred_check
      _
    $region19: #{forward.1} parent=1 // pred_check_branch
      %20 = sbr.rel (0) target = $region21
    $region20: #{forward.1} parent=1 // pred_region
      _
    $region21: #{forward.1} parent=1 // pred_fallthru
      _
    %v21 = vld [vmem:[%s1] sm:$0xff]
    %v22 = vld [vmem:[%s0] sm:$0xff]
    %v23 = vld [vmem:[%s0 + $0x8] sm:$0xff]
    %v24 = vld [vmem:[%s0 + $0x10] sm:$0xff]
    %v25 = vld [vmem:[%s0 + $0x18] sm:$0xff]
    %v26 = vld [vmem:[%s0 + $0x20] sm:$0xff]
    %v27 = vld [vmem:[%s0 + $0x28] sm:$0xff]
    %v28 = vld [vmem:[%s0 + $0x30] sm:$0xff]
    %v29 = vld [vmem:[%s0 + $0x38] sm:$0xff]
    %v30 = vld [vmem:[%s0 + $0x40] sm:$0xff]
    %v31 = vld [vmem:[%s0 + $0x48] sm:$0xff]
    %v32 = vld [vmem:[%s0 + $0x50] sm:$0xff]
    %v33 = vld [vmem:[%s0 + $0x58] sm:$0xff]
    %v34 = vld [vmem:[%s0 + $0x60] sm:$0xff]
    %v35 = vld [vmem:[%s0 + $0x68] sm:$0xff]
    %v36 = vld [vmem:[%s0 + $0x70] sm:$0xff]
    %v37 = vld [vmem:[%s0 + $0x78] sm:$0xff]
    %v38 = vld [vmem:[%s0 + $0x80] sm:$0xf]
    %v39 = vld [vmem:[%s0 + $0x88] sm:$0xf]
    %v40 = vld [vmem:[%s0 + $0x90] sm:$0xf]
    %v41 = vld [vmem:[%s0 + $0x98] sm:$0xf]
    %v42 = vld [vmem:[%s2] sm:$0xff]
    %44 = vset.pattern.permute.xlu0 0
    %45 = vperm.xlu0 %44, %v42
    %v46 = vpop.permute.xlu0 %45
    %vm48 = vcmask 293888
    %v50 = vsel %vm48, %v21, 0
    %vm52 = vcmask 1043456
    %v54 = vsel %vm52, %v38, 0
    %v57 = vsel %vm52, %v39, 0
    %v60 = vsel %vm52, %v40, 0
    %v63 = vsel %vm52, %v41, 0
    %65 = vmatprep.subr.mxu0 %v23
    %66 = vmatpush1.msra.mxu0 %v22
    %67 = vmatprep.subr.mxu0 %v27
    %68 = vmatpush1.msra.mxu0 %v26
    %69 = vmatprep.subr.mxu0 %v31
    %70 = vmatpush1.msra.mxu0 %v30
    %71 = vmatprep.subr.mxu0 %v35
    %72 = vmatpush1.msra.mxu0 %v34
    %73 = vmatprep.subr.mxu0 %v57
    %74 = vmatpush1.msra.mxu0 %v54
    %75 = vmatprep.subr.mxu0 0.0
    %76 = vmatpush1.msra.mxu0 0.0
    %77 = vmatprep.subr.mxu0 0.0
    %78 = vmatpush1.msra.mxu0 0.0
    %79 = vmatprep.subr.mxu0 0.0
    %80 = vmatpush1.msra.mxu0 0.0
    %81 = vmatprep.subr.mxu0 0.0
    %82 = vmatpush1.msra.mxu0 0.0
    %83 = vmatprep.subr.mxu0 0.0
    %84 = vmatpush1.msra.mxu0 0.0
    %85 = vmatprep.subr.mxu0 0.0
    %86 = vmatpush1.msra.mxu0 0.0
    %87 = vmatprep.subr.mxu0 0.0
    %88 = vmatpush1.msra.mxu0 0.0
    %89 = vmatprep.subr.mxu0 0.0
    %90 = vmatpush1.msra.mxu0 0.0
    %91 = vmatprep.subr.mxu0 0.0
    %92 = vmatpush1.msra.mxu0 0.0
    %93 = vmatprep.subr.mxu0 0.0
    %94 = vmatpush1.msra.mxu0 0.0
    %95 = vmatprep.subr.mxu0 0.0
    %96 = vmatpush1.msra.mxu0 0.0
    %97 = vmatprep.subr.mxu0 0.0
    %98 = vmatpush1.msra.mxu0 0.0
    %99 = vmatprep.subr.mxu0 0.0
    %100 = vmatpush1.msra.mxu0 0.0
    %101 = vmatprep.subr.mxu0 0.0
    %102 = vmatpush1.msra.mxu0 0.0
    %103 = vmatprep.subr.mxu0 0.0
    %104 = vmatpush1.msra.mxu0 0.0
    %105 = vmatprep.subr.mxu0 0.0
    %106 = vmatpush1.msra.mxu0 0.0
    %107 = vmatprep.subr.mxu0 0.0
    %108 = vmatpush1.msra.mxu0 0.0
    %109 = vmatprep.subr.mxu0 0.0
    %110 = vmatpush1.msra.mxu0 0.0
    %111 = vmatprep.subr.mxu0 0.0
    %112 = vmatpush1.msra.mxu0 0.0
    %113 = vmatprep.subr.mxu0 0.0
    %114 = vmatpush1.msra.mxu0 0.0
    %115 = vmatprep.subr.mxu0 0.0
    %116 = vmatpush1.msra.mxu0 0.0
    %117 = vmatprep.subr.mxu0 0.0
    %118 = vmatpush1.msra.mxu0 0.0
    %119 = vmatprep.subr.mxu0 0.0
    %120 = vmatpush1.msra.mxu0 0.0
    %121 = vmatprep.subr.mxu0 0.0
    %122 = vmatpush1.msra.mxu0 0.0
    %123 = vmatprep.subr.mxu0 0.0
    %124 = vmatpush1.msra.mxu0 0.0
    %125 = vmatprep.subr.mxu0 0.0
    %126 = vmatpush1.msra.mxu0 0.0
    %127 = vmatprep.subr.mxu0 0.0
    %128 = vmatpush1.msra.mxu0 0.0
    %129 = vmatprep.mubr.f32.mxu0 0.0
    %130 = vmatmul.mubr.f32.gmra.mrb[0].mxu0 %v50
    %v131 = vpop.f32.mrb[0].mxu0
    %v132 = vadd.f32 %v46, %v131
    %v133 = vpop.f32.mrb[0].mxu0
    %v134 = vadd.f32 %v46, %v133
    %135 = vdwg.mxu0
    %136 = vmatprep.subr.mxu0 %v25
    %137 = vmatpush1.msra.mxu0 %v24
    %138 = vmatprep.subr.mxu0 %v29
    %139 = vmatpush1.msra.mxu0 %v28
    %140 = vmatprep.subr.mxu0 %v33
    %141 = vmatpush1.msra.mxu0 %v32
    %142 = vmatprep.subr.mxu0 %v37
    %143 = vmatpush1.msra.mxu0 %v36
    %144 = vmatprep.subr.mxu0 %v63
    %145 = vmatpush1.msra.mxu0 %v60
    %146 = vmatprep.subr.mxu0 0.0
    %147 = vmatpush1.msra.mxu0 0.0
    %148 = vmatprep.subr.mxu0 0.0
    %149 = vmatpush1.msra.mxu0 0.0
    %150 = vmatprep.subr.mxu0 0.0
    %151 = vmatpush1.msra.mxu0 0.0
    %152 = vmatprep.subr.mxu0 0.0
    %153 = vmatpush1.msra.mxu0 0.0
    %154 = vmatprep.subr.mxu0 0.0
    %155 = vmatpush1.msra.mxu0 0.0
    %156 = vmatprep.subr.mxu0 0.0
    %157 = vmatpush1.msra.mxu0 0.0
    %158 = vmatprep.subr.mxu0 0.0
    %159 = vmatpush1.msra.mxu0 0.0
    %160 = vmatprep.subr.mxu0 0.0
    %161 = vmatpush1.msra.mxu0 0.0
    %162 = vmatprep.subr.mxu0 0.0
    %163 = vmatpush1.msra.mxu0 0.0
    %164 = vmatprep.subr.mxu0 0.0
    %165 = vmatpush1.msra.mxu0 0.0
    %166 = vmatprep.subr.mxu0 0.0
    %167 = vmatpush1.msra.mxu0 0.0
    %168 = vmatprep.subr.mxu0 0.0
    %169 = vmatpush1.msra.mxu0 0.0
    %170 = vmatprep.subr.mxu0 0.0
    %171 = vmatpush1.msra.mxu0 0.0
    %172 = vmatprep.subr.mxu0 0.0
    %173 = vmatpush1.msra.mxu0 0.0
    %174 = vmatprep.subr.mxu0 0.0
    %175 = vmatpush1.msra.mxu0 0.0
    %176 = vmatprep.subr.mxu0 0.0
    %177 = vmatpush1.msra.mxu0 0.0
    %178 = vmatprep.subr.mxu0 0.0
    %179 = vmatpush1.msra.mxu0 0.0
    %180 = vmatprep.subr.mxu0 0.0
    %181 = vmatpush1.msra.mxu0 0.0
    %182 = vmatprep.subr.mxu0 0.0
    %183 = vmatpush1.msra.mxu0 0.0
    %184 = vmatprep.subr.mxu0 0.0
    %185 = vmatpush1.msra.mxu0 0.0
    %186 = vmatprep.subr.mxu0 0.0
    %187 = vmatpush1.msra.mxu0 0.0
    %188 = vmatprep.subr.mxu0 0.0
    %189 = vmatpush1.msra.mxu0 0.0
    %190 = vmatprep.subr.mxu0 0.0
    %191 = vmatpush1.msra.mxu0 0.0
    %192 = vmatprep.subr.mxu0 0.0
    %193 = vmatpush1.msra.mxu0 0.0
    %194 = vmatprep.subr.mxu0 0.0
    %195 = vmatpush1.msra.mxu0 0.0
    %196 = vmatprep.subr.mxu0 0.0
    %197 = vmatpush1.msra.mxu0 0.0
    %198 = vmatprep.subr.mxu0 0.0
    %199 = vmatpush1.msra.mxu0 0.0
    %200 = vmatprep.mubr.f32.mxu0 0.0
    %201 = vmatmul.mubr.f32.gmra.mrb[0].mxu0 %v50
    %v202 = vpop.f32.mrb[0].mxu0
    %v203 = vadd.f32 %v46, %v202
    %v204 = vpop.f32.mrb[0].mxu0
    %v205 = vadd.f32 %v46, %v204
    %206 = vdwg.mxu0
    %v207 = vmax.f32 %v132, 0.0
    %v208 = vmax.f32 %v134, 0.0
    %v209 = vmax.f32 %v203, 0.0
    %v210 = vmax.f32 %v205, 0.0
    %v211 = vld [vmem:[%s4] sm:$0x1]
    %v212 = vld [vmem:[%s3] sm:$0xff]
    %v213 = vld [vmem:[%s3 + $0x8] sm:$0xff]
    %v214 = vld [vmem:[%s3 + $0x10] sm:$0xff]
    %v215 = vld [vmem:[%s3 + $0x18] sm:$0xff]
    %v216 = vld [vmem:[%s3 + $0x20] sm:$0xff]
    %v217 = vld [vmem:[%s3 + $0x28] sm:$0xff]
    %v218 = vld [vmem:[%s3 + $0x30] sm:$0xff]
    %v219 = vld [vmem:[%s3 + $0x38] sm:$0xff]
    %v220 = vld [vmem:[%s3 + $0x40] sm:$0xff]
    %v221 = vld [vmem:[%s3 + $0x48] sm:$0xff]
    %v222 = vld [vmem:[%s3 + $0x50] sm:$0xff]
    %v223 = vld [vmem:[%s3 + $0x58] sm:$0xff]
    %v224 = vld [vmem:[%s3 + $0x60] sm:$0xff]
    %v225 = vld [vmem:[%s3 + $0x68] sm:$0xff]
    %v226 = vld [vmem:[%s3 + $0x70] sm:$0xff]
    %v227 = vld [vmem:[%s3 + $0x78] sm:$0xff]
    %v228 = vld [vmem:[%s3 + $0x80] sm:$0xff]
    %v229 = vld [vmem:[%s3 + $0x88] sm:$0xff]
    %v230 = vld [vmem:[%s3 + $0x90] sm:$0xff]
    %v231 = vld [vmem:[%s3 + $0x98] sm:$0xff]
    %v232 = vld [vmem:[%s3 + $0xa0] sm:$0xff]
    %v233 = vld [vmem:[%s3 + $0xa8] sm:$0xff]
    %v234 = vld [vmem:[%s3 + $0xb0] sm:$0xff]
    %v235 = vld [vmem:[%s3 + $0xb8] sm:$0xff]
    %v236 = vld [vmem:[%s3 + $0xc0] sm:$0xff]
    %v237 = vld [vmem:[%s3 + $0xc8] sm:$0xff]
    %v238 = vld [vmem:[%s3 + $0xd0] sm:$0xff]
    %v239 = vld [vmem:[%s3 + $0xd8] sm:$0xff]
    %v240 = vld [vmem:[%s3 + $0xe0] sm:$0xff]
    %v241 = vld [vmem:[%s3 + $0xe8] sm:$0xff]
    %v242 = vld [vmem:[%s3 + $0xf0] sm:$0xff]
    %v243 = vld [vmem:[%s3 + $0xf8] sm:$0xff]
    %244 = vmatprep.subr.mxu0 0.0
    %245 = vmatpush1.msra.mxu0 %v212
    %246 = vmatprep.subr.mxu0 0.0
    %247 = vmatpush1.msra.mxu0 %v213
    %248 = vmatprep.subr.mxu0 0.0
    %249 = vmatpush1.msra.mxu0 %v214
    %250 = vmatprep.subr.mxu0 0.0
    %251 = vmatpush1.msra.mxu0 %v215
    %252 = vmatprep.subr.mxu0 0.0
    %253 = vmatpush1.msra.mxu0 %v216
    %254 = vmatprep.subr.mxu0 0.0
    %255 = vmatpush1.msra.mxu0 %v217
    %256 = vmatprep.subr.mxu0 0.0
    %257 = vmatpush1.msra.mxu0 %v218
    %258 = vmatprep.subr.mxu0 0.0
    %259 = vmatpush1.msra.mxu0 %v219
    %260 = vmatprep.subr.mxu0 0.0
    %261 = vmatpush1.msra.mxu0 %v220
    %262 = vmatprep.subr.mxu0 0.0
    %263 = vmatpush1.msra.mxu0 %v221
    %264 = vmatprep.subr.mxu0 0.0
    %265 = vmatpush1.msra.mxu0 %v222
    %266 = vmatprep.subr.mxu0 0.0
    %267 = vmatpush1.msra.mxu0 %v223
    %268 = vmatprep.subr.mxu0 0.0
    %269 = vmatpush1.msra.mxu0 %v224
    %270 = vmatprep.subr.mxu0 0.0
    %271 = vmatpush1.msra.mxu0 %v225
    %272 = vmatprep.subr.mxu0 0.0
    %273 = vmatpush1.msra.mxu0 %v226
    %274 = vmatprep.subr.mxu0 0.0
    %275 = vmatpush1.msra.mxu0 %v227
    %276 = vmatprep.subr.mxu0 0.0
    %277 = vmatpush1.msra.mxu0 %v228
    %278 = vmatprep.subr.mxu0 0.0
    %279 = vmatpush1.msra.mxu0 %v229
    %280 = vmatprep.subr.mxu0 0.0
    %281 = vmatpush1.msra.mxu0 %v230
    %282 = vmatprep.subr.mxu0 0.0
    %283 = vmatpush1.msra.mxu0 %v231
    %284 = vmatprep.subr.mxu0 0.0
    %285 = vmatpush1.msra.mxu0 %v232
    %286 = vmatprep.subr.mxu0 0.0
    %287 = vmatpush1.msra.mxu0 %v233
    %288 = vmatprep.subr.mxu0 0.0
    %289 = vmatpush1.msra.mxu0 %v234
    %290 = vmatprep.subr.mxu0 0.0
    %291 = vmatpush1.msra.mxu0 %v235
    %292 = vmatprep.subr.mxu0 0.0
    %293 = vmatpush1.msra.mxu0 %v236
    %294 = vmatprep.subr.mxu0 0.0
    %295 = vmatpush1.msra.mxu0 %v237
    %296 = vmatprep.subr.mxu0 0.0
    %297 = vmatpush1.msra.mxu0 %v238
    %298 = vmatprep.subr.mxu0 0.0
    %299 = vmatpush1.msra.mxu0 %v239
    %300 = vmatprep.subr.mxu0 0.0
    %301 = vmatpush1.msra.mxu0 %v240
    %302 = vmatprep.subr.mxu0 0.0
    %303 = vmatpush1.msra.mxu0 %v241
    %304 = vmatprep.subr.mxu0 0.0
    %305 = vmatpush1.msra.mxu0 %v242
    %306 = vmatprep.subr.mxu0 0.0
    %307 = vmatpush1.msra.mxu0 %v243
    %308 = vmatprep.mubr.f32.mxu0 %v208
    %309 = vmatmul.mubr.f32.gmra.mrb[0].mxu0 %v207
    %v310 = vpop.f32.mrb[0].mxu0
    %v311 = vadd.f32 0.0, %v310
    %v312 = vpop.f32.mrb[0].mxu0
    %313 = vdwg.mxu0
    %v314 = vadd.f32 %v211, %v311
    %s315 = scalar_lea.vmem %s3, 256
    %v316 = vld [vmem:[%s315] sm:$0xff]
    %v317 = vld [vmem:[%s315 + $0x8] sm:$0xff]
    %v318 = vld [vmem:[%s315 + $0x10] sm:$0xff]
    %v319 = vld [vmem:[%s315 + $0x18] sm:$0xff]
    %v320 = vld [vmem:[%s315 + $0x20] sm:$0xff]
    %v321 = vld [vmem:[%s315 + $0x28] sm:$0xff]
    %v322 = vld [vmem:[%s315 + $0x30] sm:$0xff]
    %v323 = vld [vmem:[%s315 + $0x38] sm:$0xff]
    %v324 = vld [vmem:[%s315 + $0x40] sm:$0xff]
    %v325 = vld [vmem:[%s315 + $0x48] sm:$0xff]
    %v326 = vld [vmem:[%s315 + $0x50] sm:$0xff]
    %v327 = vld [vmem:[%s315 + $0x58] sm:$0xff]
    %v328 = vld [vmem:[%s315 + $0x60] sm:$0xff]
    %v329 = vld [vmem:[%s315 + $0x68] sm:$0xff]
    %v330 = vld [vmem:[%s315 + $0x70] sm:$0xff]
    %v331 = vld [vmem:[%s315 + $0x78] sm:$0xff]
    %v332 = vld [vmem:[%s315 + $0x80] sm:$0xff]
    %v333 = vld [vmem:[%s315 + $0x88] sm:$0xff]
    %v334 = vld [vmem:[%s315 + $0x90] sm:$0xff]
    %v335 = vld [vmem:[%s315 + $0x98] sm:$0xff]
    %v336 = vld [vmem:[%s315 + $0xa0] sm:$0xff]
    %v337 = vld [vmem:[%s315 + $0xa8] sm:$0xff]
    %v338 = vld [vmem:[%s315 + $0xb0] sm:$0xff]
    %v339 = vld [vmem:[%s315 + $0xb8] sm:$0xff]
    %v340 = vld [vmem:[%s315 + $0xc0] sm:$0xff]
    %v341 = vld [vmem:[%s315 + $0xc8] sm:$0xff]
    %v342 = vld [vmem:[%s315 + $0xd0] sm:$0xff]
    %v343 = vld [vmem:[%s315 + $0xd8] sm:$0xff]
    %v344 = vld [vmem:[%s315 + $0xe0] sm:$0xff]
    %v345 = vld [vmem:[%s315 + $0xe8] sm:$0xff]
    %v346 = vld [vmem:[%s315 + $0xf0] sm:$0xff]
    %v347 = vld [vmem:[%s315 + $0xf8] sm:$0xff]
    %v350 = vrot.slane %v207, 1
    %v351 = vrot.slane %v208, 1
    %354 = vmatprep.subr.mxu0 0.0
    %355 = vmatpush1.msra.mxu0 %v316
    %356 = vmatprep.subr.mxu0 0.0
    %357 = vmatpush1.msra.mxu0 %v317
    %358 = vmatprep.subr.mxu0 0.0
    %359 = vmatpush1.msra.mxu0 %v318
    %360 = vmatprep.subr.mxu0 0.0
    %361 = vmatpush1.msra.mxu0 %v319
    %362 = vmatprep.subr.mxu0 0.0
    %363 = vmatpush1.msra.mxu0 %v320
    %364 = vmatprep.subr.mxu0 0.0
    %365 = vmatpush1.msra.mxu0 %v321
    %366 = vmatprep.subr.mxu0 0.0
    %367 = vmatpush1.msra.mxu0 %v322
    %368 = vmatprep.subr.mxu0 0.0
    %369 = vmatpush1.msra.mxu0 %v323
    %370 = vmatprep.subr.mxu0 0.0
    %371 = vmatpush1.msra.mxu0 %v324
    %372 = vmatprep.subr.mxu0 0.0
    %373 = vmatpush1.msra.mxu0 %v325
    %374 = vmatprep.subr.mxu0 0.0
    %375 = vmatpush1.msra.mxu0 %v326
    %376 = vmatprep.subr.mxu0 0.0
    %377 = vmatpush1.msra.mxu0 %v327
    %378 = vmatprep.subr.mxu0 0.0
    %379 = vmatpush1.msra.mxu0 %v328
    %380 = vmatprep.subr.mxu0 0.0
    %381 = vmatpush1.msra.mxu0 %v329
    %382 = vmatprep.subr.mxu0 0.0
    %383 = vmatpush1.msra.mxu0 %v330
    %384 = vmatprep.subr.mxu0 0.0
    %385 = vmatpush1.msra.mxu0 %v331
    %386 = vmatprep.subr.mxu0 0.0
    %387 = vmatpush1.msra.mxu0 %v332
    %388 = vmatprep.subr.mxu0 0.0
    %389 = vmatpush1.msra.mxu0 %v333
    %390 = vmatprep.subr.mxu0 0.0
    %391 = vmatpush1.msra.mxu0 %v334
    %392 = vmatprep.subr.mxu0 0.0
    %393 = vmatpush1.msra.mxu0 %v335
    %394 = vmatprep.subr.mxu0 0.0
    %395 = vmatpush1.msra.mxu0 %v336
    %396 = vmatprep.subr.mxu0 0.0
    %397 = vmatpush1.msra.mxu0 %v337
    %398 = vmatprep.subr.mxu0 0.0
    %399 = vmatpush1.msra.mxu0 %v338
    %400 = vmatprep.subr.mxu0 0.0
    %401 = vmatpush1.msra.mxu0 %v339
    %402 = vmatprep.subr.mxu0 0.0
    %403 = vmatpush1.msra.mxu0 %v340
    %404 = vmatprep.subr.mxu0 0.0
    %405 = vmatpush1.msra.mxu0 %v341
    %406 = vmatprep.subr.mxu0 0.0
    %407 = vmatpush1.msra.mxu0 %v342
    %408 = vmatprep.subr.mxu0 0.0
    %409 = vmatpush1.msra.mxu0 %v343
    %410 = vmatprep.subr.mxu0 0.0
    %411 = vmatpush1.msra.mxu0 %v344
    %412 = vmatprep.subr.mxu0 0.0
    %413 = vmatpush1.msra.mxu0 %v345
    %414 = vmatprep.subr.mxu0 0.0
    %415 = vmatpush1.msra.mxu0 %v346
    %416 = vmatprep.subr.mxu0 0.0
    %417 = vmatpush1.msra.mxu0 %v347
    %418 = vmatprep.mubr.f32.mxu0 %v351
    %419 = vmatmul.mubr.f32.gmra.mrb[0].mxu0 %v350
    %v420 = vpop.f32.mrb[0].mxu0
    %v421 = vadd.f32 0.0, %v420
    %v422 = vpop.f32.mrb[0].mxu0
    %423 = vdwg.mxu0
    %v424 = vadd.f32 %v314, %v421
    %s425 = scalar_lea.vmem %s3, 512
    %v426 = vld [vmem:[%s425] sm:$0xff]
    %v427 = vld [vmem:[%s425 + $0x8] sm:$0xff]
    %v428 = vld [vmem:[%s425 + $0x10] sm:$0xff]
    %v429 = vld [vmem:[%s425 + $0x18] sm:$0xff]
    %v430 = vld [vmem:[%s425 + $0x20] sm:$0xff]
    %v431 = vld [vmem:[%s425 + $0x28] sm:$0xff]
    %v432 = vld [vmem:[%s425 + $0x30] sm:$0xff]
    %v433 = vld [vmem:[%s425 + $0x38] sm:$0xff]
    %v434 = vld [vmem:[%s425 + $0x40] sm:$0xff]
    %v435 = vld [vmem:[%s425 + $0x48] sm:$0xff]
    %v436 = vld [vmem:[%s425 + $0x50] sm:$0xff]
    %v437 = vld [vmem:[%s425 + $0x58] sm:$0xff]
    %v438 = vld [vmem:[%s425 + $0x60] sm:$0xff]
    %v439 = vld [vmem:[%s425 + $0x68] sm:$0xff]
    %v440 = vld [vmem:[%s425 + $0x70] sm:$0xff]
    %v441 = vld [vmem:[%s425 + $0x78] sm:$0xff]
    %v442 = vld [vmem:[%s425 + $0x80] sm:$0xff]
    %v443 = vld [vmem:[%s425 + $0x88] sm:$0xff]
    %v444 = vld [vmem:[%s425 + $0x90] sm:$0xff]
    %v445 = vld [vmem:[%s425 + $0x98] sm:$0xff]
    %v446 = vld [vmem:[%s425 + $0xa0] sm:$0xff]
    %v447 = vld [vmem:[%s425 + $0xa8] sm:$0xff]
    %v448 = vld [vmem:[%s425 + $0xb0] sm:$0xff]
    %v449 = vld [vmem:[%s425 + $0xb8] sm:$0xff]
    %v450 = vld [vmem:[%s425 + $0xc0] sm:$0xff]
    %v451 = vld [vmem:[%s425 + $0xc8] sm:$0xff]
    %v452 = vld [vmem:[%s425 + $0xd0] sm:$0xff]
    %v453 = vld [vmem:[%s425 + $0xd8] sm:$0xff]
    %v454 = vld [vmem:[%s425 + $0xe0] sm:$0xff]
    %v455 = vld [vmem:[%s425 + $0xe8] sm:$0xff]
    %v456 = vld [vmem:[%s425 + $0xf0] sm:$0xff]
    %v457 = vld [vmem:[%s425 + $0xf8] sm:$0xff]
    %v458 = vrot.slane %v207, 2
    %v459 = vrot.slane %v208, 2
    %462 = vmatprep.subr.mxu0 0.0
    %463 = vmatpush1.msra.mxu0 %v426
    %464 = vmatprep.subr.mxu0 0.0
    %465 = vmatpush1.msra.mxu0 %v427
    %466 = vmatprep.subr.mxu0 0.0
    %467 = vmatpush1.msra.mxu0 %v428
    %468 = vmatprep.subr.mxu0 0.0
    %469 = vmatpush1.msra.mxu0 %v429
    %470 = vmatprep.subr.mxu0 0.0
    %471 = vmatpush1.msra.mxu0 %v430
    %472 = vmatprep.subr.mxu0 0.0
    %473 = vmatpush1.msra.mxu0 %v431
    %474 = vmatprep.subr.mxu0 0.0
    %475 = vmatpush1.msra.mxu0 %v432
    %476 = vmatprep.subr.mxu0 0.0
    %477 = vmatpush1.msra.mxu0 %v433
    %478 = vmatprep.subr.mxu0 0.0
    %479 = vmatpush1.msra.mxu0 %v434
    %480 = vmatprep.subr.mxu0 0.0
    %481 = vmatpush1.msra.mxu0 %v435
    %482 = vmatprep.subr.mxu0 0.0
    %483 = vmatpush1.msra.mxu0 %v436
    %484 = vmatprep.subr.mxu0 0.0
    %485 = vmatpush1.msra.mxu0 %v437
    %486 = vmatprep.subr.mxu0 0.0
    %487 = vmatpush1.msra.mxu0 %v438
    %488 = vmatprep.subr.mxu0 0.0
    %489 = vmatpush1.msra.mxu0 %v439
    %490 = vmatprep.subr.mxu0 0.0
    %491 = vmatpush1.msra.mxu0 %v440
    %492 = vmatprep.subr.mxu0 0.0
    %493 = vmatpush1.msra.mxu0 %v441
    %494 = vmatprep.subr.mxu0 0.0
    %495 = vmatpush1.msra.mxu0 %v442
    %496 = vmatprep.subr.mxu0 0.0
    %497 = vmatpush1.msra.mxu0 %v443
    %498 = vmatprep.subr.mxu0 0.0
    %499 = vmatpush1.msra.mxu0 %v444
    %500 = vmatprep.subr.mxu0 0.0
    %501 = vmatpush1.msra.mxu0 %v445
    %502 = vmatprep.subr.mxu0 0.0
    %503 = vmatpush1.msra.mxu0 %v446
    %504 = vmatprep.subr.mxu0 0.0
    %505 = vmatpush1.msra.mxu0 %v447
    %506 = vmatprep.subr.mxu0 0.0
    %507 = vmatpush1.msra.mxu0 %v448
    %508 = vmatprep.subr.mxu0 0.0
    %509 = vmatpush1.msra.mxu0 %v449
    %510 = vmatprep.subr.mxu0 0.0
    %511 = vmatpush1.msra.mxu0 %v450
    %512 = vmatprep.subr.mxu0 0.0
    %513 = vmatpush1.msra.mxu0 %v451
    %514 = vmatprep.subr.mxu0 0.0
    %515 = vmatpush1.msra.mxu0 %v452
    %516 = vmatprep.subr.mxu0 0.0
    %517 = vmatpush1.msra.mxu0 %v453
    %518 = vmatprep.subr.mxu0 0.0
    %519 = vmatpush1.msra.mxu0 %v454
    %520 = vmatprep.subr.mxu0 0.0
    %521 = vmatpush1.msra.mxu0 %v455
    %522 = vmatprep.subr.mxu0 0.0
    %523 = vmatpush1.msra.mxu0 %v456
    %524 = vmatprep.subr.mxu0 0.0
    %525 = vmatpush1.msra.mxu0 %v457
    %526 = vmatprep.mubr.f32.mxu0 %v459
    %527 = vmatmul.mubr.f32.gmra.mrb[0].mxu0 %v458
    %v528 = vpop.f32.mrb[0].mxu0
    %v529 = vadd.f32 0.0, %v528
    %v530 = vpop.f32.mrb[0].mxu0
    %531 = vdwg.mxu0
    %v532 = vadd.f32 %v424, %v529
    %s533 = scalar_lea.vmem %s3, 768
    %v534 = vld [vmem:[%s533] sm:$0xff]
    %v535 = vld [vmem:[%s533 + $0x8] sm:$0xff]
    %v536 = vld [vmem:[%s533 + $0x10] sm:$0xff]
    %v537 = vld [vmem:[%s533 + $0x18] sm:$0xff]
    %v538 = vld [vmem:[%s533 + $0x20] sm:$0xff]
    %v539 = vld [vmem:[%s533 + $0x28] sm:$0xff]
    %v540 = vld [vmem:[%s533 + $0x30] sm:$0xff]
    %v541 = vld [vmem:[%s533 + $0x38] sm:$0xff]
    %v542 = vld [vmem:[%s533 + $0x40] sm:$0xff]
    %v543 = vld [vmem:[%s533 + $0x48] sm:$0xff]
    %v544 = vld [vmem:[%s533 + $0x50] sm:$0xff]
    %v545 = vld [vmem:[%s533 + $0x58] sm:$0xff]
    %v546 = vld [vmem:[%s533 + $0x60] sm:$0xff]
    %v547 = vld [vmem:[%s533 + $0x68] sm:$0xff]
    %v548 = vld [vmem:[%s533 + $0x70] sm:$0xff]
    %v549 = vld [vmem:[%s533 + $0x78] sm:$0xff]
    %v550 = vld [vmem:[%s533 + $0x80] sm:$0xff]
    %v551 = vld [vmem:[%s533 + $0x88] sm:$0xff]
    %v552 = vld [vmem:[%s533 + $0x90] sm:$0xff]
    %v553 = vld [vmem:[%s533 + $0x98] sm:$0xff]
    %v554 = vld [vmem:[%s533 + $0xa0] sm:$0xff]
    %v555 = vld [vmem:[%s533 + $0xa8] sm:$0xff]
    %v556 = vld [vmem:[%s533 + $0xb0] sm:$0xff]
    %v557 = vld [vmem:[%s533 + $0xb8] sm:$0xff]
    %v558 = vld [vmem:[%s533 + $0xc0] sm:$0xff]
    %v559 = vld [vmem:[%s533 + $0xc8] sm:$0xff]
    %v560 = vld [vmem:[%s533 + $0xd0] sm:$0xff]
    %v561 = vld [vmem:[%s533 + $0xd8] sm:$0xff]
    %v562 = vld [vmem:[%s533 + $0xe0] sm:$0xff]
    %v563 = vld [vmem:[%s533 + $0xe8] sm:$0xff]
    %v564 = vld [vmem:[%s533 + $0xf0] sm:$0xff]
    %v565 = vld [vmem:[%s533 + $0xf8] sm:$0xff]
    %v566 = vrot.slane %v207, 3
    %v567 = vrot.slane %v208, 3
    %570 = vmatprep.subr.mxu0 0.0
    %571 = vmatpush1.msra.mxu0 %v534
    %572 = vmatprep.subr.mxu0 0.0
    %573 = vmatpush1.msra.mxu0 %v535
    %574 = vmatprep.subr.mxu0 0.0
    %575 = vmatpush1.msra.mxu0 %v536
    %576 = vmatprep.subr.mxu0 0.0
    %577 = vmatpush1.msra.mxu0 %v537
    %578 = vmatprep.subr.mxu0 0.0
    %579 = vmatpush1.msra.mxu0 %v538
    %580 = vmatprep.subr.mxu0 0.0
    %581 = vmatpush1.msra.mxu0 %v539
    %582 = vmatprep.subr.mxu0 0.0
    %583 = vmatpush1.msra.mxu0 %v540
    %584 = vmatprep.subr.mxu0 0.0
    %585 = vmatpush1.msra.mxu0 %v541
    %586 = vmatprep.subr.mxu0 0.0
    %587 = vmatpush1.msra.mxu0 %v542
    %588 = vmatprep.subr.mxu0 0.0
    %589 = vmatpush1.msra.mxu0 %v543
    %590 = vmatprep.subr.mxu0 0.0
    %591 = vmatpush1.msra.mxu0 %v544
    %592 = vmatprep.subr.mxu0 0.0
    %593 = vmatpush1.msra.mxu0 %v545
    %594 = vmatprep.subr.mxu0 0.0
    %595 = vmatpush1.msra.mxu0 %v546
    %596 = vmatprep.subr.mxu0 0.0
    %597 = vmatpush1.msra.mxu0 %v547
    %598 = vmatprep.subr.mxu0 0.0
    %599 = vmatpush1.msra.mxu0 %v548
    %600 = vmatprep.subr.mxu0 0.0
    %601 = vmatpush1.msra.mxu0 %v549
    %602 = vmatprep.subr.mxu0 0.0
    %603 = vmatpush1.msra.mxu0 %v550
    %604 = vmatprep.subr.mxu0 0.0
    %605 = vmatpush1.msra.mxu0 %v551
    %606 = vmatprep.subr.mxu0 0.0
    %607 = vmatpush1.msra.mxu0 %v552
    %608 = vmatprep.subr.mxu0 0.0
    %609 = vmatpush1.msra.mxu0 %v553
    %610 = vmatprep.subr.mxu0 0.0
    %611 = vmatpush1.msra.mxu0 %v554
    %612 = vmatprep.subr.mxu0 0.0
    %613 = vmatpush1.msra.mxu0 %v555
    %614 = vmatprep.subr.mxu0 0.0
    %615 = vmatpush1.msra.mxu0 %v556
    %616 = vmatprep.subr.mxu0 0.0
    %617 = vmatpush1.msra.mxu0 %v557
    %618 = vmatprep.subr.mxu0 0.0
    %619 = vmatpush1.msra.mxu0 %v558
    %620 = vmatprep.subr.mxu0 0.0
    %621 = vmatpush1.msra.mxu0 %v559
    %622 = vmatprep.subr.mxu0 0.0
    %623 = vmatpush1.msra.mxu0 %v560
    %624 = vmatprep.subr.mxu0 0.0
    %625 = vmatpush1.msra.mxu0 %v561
    %626 = vmatprep.subr.mxu0 0.0
    %627 = vmatpush1.msra.mxu0 %v562
    %628 = vmatprep.subr.mxu0 0.0
    %629 = vmatpush1.msra.mxu0 %v563
    %630 = vmatprep.subr.mxu0 0.0
    %631 = vmatpush1.msra.mxu0 %v564
    %632 = vmatprep.subr.mxu0 0.0
    %633 = vmatpush1.msra.mxu0 %v565
    %634 = vmatprep.mubr.f32.mxu0 %v567
    %635 = vmatmul.mubr.f32.gmra.mrb[0].mxu0 %v566
    %v636 = vpop.f32.mrb[0].mxu0
    %v637 = vadd.f32 0.0, %v636
    %v638 = vpop.f32.mrb[0].mxu0
    %639 = vdwg.mxu0
    %v640 = vadd.f32 %v532, %v637
    %s641 = scalar_lea.vmem %s3, 1024
    %v642 = vld [vmem:[%s641] sm:$0xff]
    %v643 = vld [vmem:[%s641 + $0x8] sm:$0xff]
    %v644 = vld [vmem:[%s641 + $0x10] sm:$0xff]
    %v645 = vld [vmem:[%s641 + $0x18] sm:$0xff]
    %v646 = vld [vmem:[%s641 + $0x20] sm:$0xff]
    %v647 = vld [vmem:[%s641 + $0x28] sm:$0xff]
    %v648 = vld [vmem:[%s641 + $0x30] sm:$0xff]
    %v649 = vld [vmem:[%s641 + $0x38] sm:$0xff]
    %v650 = vld [vmem:[%s641 + $0x40] sm:$0xff]
    %v651 = vld [vmem:[%s641 + $0x48] sm:$0xff]
    %v652 = vld [vmem:[%s641 + $0x50] sm:$0xff]
    %v653 = vld [vmem:[%s641 + $0x58] sm:$0xff]
    %v654 = vld [vmem:[%s641 + $0x60] sm:$0xff]
    %v655 = vld [vmem:[%s641 + $0x68] sm:$0xff]
    %v656 = vld [vmem:[%s641 + $0x70] sm:$0xff]
    %v657 = vld [vmem:[%s641 + $0x78] sm:$0xff]
    %v658 = vld [vmem:[%s641 + $0x80] sm:$0xff]
    %v659 = vld [vmem:[%s641 + $0x88] sm:$0xff]
    %v660 = vld [vmem:[%s641 + $0x90] sm:$0xff]
    %v661 = vld [vmem:[%s641 + $0x98] sm:$0xff]
    %v662 = vld [vmem:[%s641 + $0xa0] sm:$0xff]
    %v663 = vld [vmem:[%s641 + $0xa8] sm:$0xff]
    %v664 = vld [vmem:[%s641 + $0xb0] sm:$0xff]
    %v665 = vld [vmem:[%s641 + $0xb8] sm:$0xff]
    %v666 = vld [vmem:[%s641 + $0xc0] sm:$0xff]
    %v667 = vld [vmem:[%s641 + $0xc8] sm:$0xff]
    %v668 = vld [vmem:[%s641 + $0xd0] sm:$0xff]
    %v669 = vld [vmem:[%s641 + $0xd8] sm:$0xff]
    %v670 = vld [vmem:[%s641 + $0xe0] sm:$0xff]
    %v671 = vld [vmem:[%s641 + $0xe8] sm:$0xff]
    %v672 = vld [vmem:[%s641 + $0xf0] sm:$0xff]
    %v673 = vld [vmem:[%s641 + $0xf8] sm:$0xff]
    %v674 = vrot.slane %v207, 4
    %v675 = vrot.slane %v208, 4
    %678 = vmatprep.subr.mxu0 0.0
    %679 = vmatpush1.msra.mxu0 %v642
    %680 = vmatprep.subr.mxu0 0.0
    %681 = vmatpush1.msra.mxu0 %v643
    %682 = vmatprep.subr.mxu0 0.0
    %683 = vmatpush1.msra.mxu0 %v644
    %684 = vmatprep.subr.mxu0 0.0
    %685 = vmatpush1.msra.mxu0 %v645
    %686 = vmatprep.subr.mxu0 0.0
    %687 = vmatpush1.msra.mxu0 %v646
    %688 = vmatprep.subr.mxu0 0.0
    %689 = vmatpush1.msra.mxu0 %v647
    %690 = vmatprep.subr.mxu0 0.0
    %691 = vmatpush1.msra.mxu0 %v648
    %692 = vmatprep.subr.mxu0 0.0
    %693 = vmatpush1.msra.mxu0 %v649
    %694 = vmatprep.subr.mxu0 0.0
    %695 = vmatpush1.msra.mxu0 %v650
    %696 = vmatprep.subr.mxu0 0.0
    %697 = vmatpush1.msra.mxu0 %v651
    %698 = vmatprep.subr.mxu0 0.0
    %699 = vmatpush1.msra.mxu0 %v652
    %700 = vmatprep.subr.mxu0 0.0
    %701 = vmatpush1.msra.mxu0 %v653
    %702 = vmatprep.subr.mxu0 0.0
    %703 = vmatpush1.msra.mxu0 %v654
    %704 = vmatprep.subr.mxu0 0.0
    %705 = vmatpush1.msra.mxu0 %v655
    %706 = vmatprep.subr.mxu0 0.0
    %707 = vmatpush1.msra.mxu0 %v656
    %708 = vmatprep.subr.mxu0 0.0
    %709 = vmatpush1.msra.mxu0 %v657
    %710 = vmatprep.subr.mxu0 0.0
    %711 = vmatpush1.msra.mxu0 %v658
    %712 = vmatprep.subr.mxu0 0.0
    %713 = vmatpush1.msra.mxu0 %v659
    %714 = vmatprep.subr.mxu0 0.0
    %715 = vmatpush1.msra.mxu0 %v660
    %716 = vmatprep.subr.mxu0 0.0
    %717 = vmatpush1.msra.mxu0 %v661
    %718 = vmatprep.subr.mxu0 0.0
    %719 = vmatpush1.msra.mxu0 %v662
    %720 = vmatprep.subr.mxu0 0.0
    %721 = vmatpush1.msra.mxu0 %v663
    %722 = vmatprep.subr.mxu0 0.0
    %723 = vmatpush1.msra.mxu0 %v664
    %724 = vmatprep.subr.mxu0 0.0
    %725 = vmatpush1.msra.mxu0 %v665
    %726 = vmatprep.subr.mxu0 0.0
    %727 = vmatpush1.msra.mxu0 %v666
    %728 = vmatprep.subr.mxu0 0.0
    %729 = vmatpush1.msra.mxu0 %v667
    %730 = vmatprep.subr.mxu0 0.0
    %731 = vmatpush1.msra.mxu0 %v668
    %732 = vmatprep.subr.mxu0 0.0
    %733 = vmatpush1.msra.mxu0 %v669
    %734 = vmatprep.subr.mxu0 0.0
    %735 = vmatpush1.msra.mxu0 %v670
    %736 = vmatprep.subr.mxu0 0.0
    %737 = vmatpush1.msra.mxu0 %v671
    %738 = vmatprep.subr.mxu0 0.0
    %739 = vmatpush1.msra.mxu0 %v672
    %740 = vmatprep.subr.mxu0 0.0
    %741 = vmatpush1.msra.mxu0 %v673
    %742 = vmatprep.mubr.f32.mxu0 %v675
    %743 = vmatmul.mubr.f32.gmra.mrb[0].mxu0 %v674
    %v744 = vpop.f32.mrb[0].mxu0
    %v745 = vadd.f32 0.0, %v744
    %v746 = vpop.f32.mrb[0].mxu0
    %747 = vdwg.mxu0
    %v748 = vadd.f32 %v640, %v745
    %s749 = scalar_lea.vmem %s3, 1280
    %v750 = vld [vmem:[%s749] sm:$0xff]
    %v751 = vld [vmem:[%s749 + $0x8] sm:$0xff]
    %v752 = vld [vmem:[%s749 + $0x10] sm:$0xff]
    %v753 = vld [vmem:[%s749 + $0x18] sm:$0xff]
    %v754 = vld [vmem:[%s749 + $0x20] sm:$0xff]
    %v755 = vld [vmem:[%s749 + $0x28] sm:$0xff]
    %v756 = vld [vmem:[%s749 + $0x30] sm:$0xff]
    %v757 = vld [vmem:[%s749 + $0x38] sm:$0xff]
    %v758 = vld [vmem:[%s749 + $0x40] sm:$0xff]
    %v759 = vld [vmem:[%s749 + $0x48] sm:$0xff]
    %v760 = vld [vmem:[%s749 + $0x50] sm:$0xff]
    %v761 = vld [vmem:[%s749 + $0x58] sm:$0xff]
    %v762 = vld [vmem:[%s749 + $0x60] sm:$0xff]
    %v763 = vld [vmem:[%s749 + $0x68] sm:$0xff]
    %v764 = vld [vmem:[%s749 + $0x70] sm:$0xff]
    %v765 = vld [vmem:[%s749 + $0x78] sm:$0xff]
    %v766 = vld [vmem:[%s749 + $0x80] sm:$0xff]
    %v767 = vld [vmem:[%s749 + $0x88] sm:$0xff]
    %v768 = vld [vmem:[%s749 + $0x90] sm:$0xff]
    %v769 = vld [vmem:[%s749 + $0x98] sm:$0xff]
    %v770 = vld [vmem:[%s749 + $0xa0] sm:$0xff]
    %v771 = vld [vmem:[%s749 + $0xa8] sm:$0xff]
    %v772 = vld [vmem:[%s749 + $0xb0] sm:$0xff]
    %v773 = vld [vmem:[%s749 + $0xb8] sm:$0xff]
    %v774 = vld [vmem:[%s749 + $0xc0] sm:$0xff]
    %v775 = vld [vmem:[%s749 + $0xc8] sm:$0xff]
    %v776 = vld [vmem:[%s749 + $0xd0] sm:$0xff]
    %v777 = vld [vmem:[%s749 + $0xd8] sm:$0xff]
    %v778 = vld [vmem:[%s749 + $0xe0] sm:$0xff]
    %v779 = vld [vmem:[%s749 + $0xe8] sm:$0xff]
    %v780 = vld [vmem:[%s749 + $0xf0] sm:$0xff]
    %v781 = vld [vmem:[%s749 + $0xf8] sm:$0xff]
    %v782 = vrot.slane %v207, 5
    %v783 = vrot.slane %v208, 5
    %786 = vmatprep.subr.mxu0 0.0
    %787 = vmatpush1.msra.mxu0 %v750
    %788 = vmatprep.subr.mxu0 0.0
    %789 = vmatpush1.msra.mxu0 %v751
    %790 = vmatprep.subr.mxu0 0.0
    %791 = vmatpush1.msra.mxu0 %v752
    %792 = vmatprep.subr.mxu0 0.0
    %793 = vmatpush1.msra.mxu0 %v753
    %794 = vmatprep.subr.mxu0 0.0
    %795 = vmatpush1.msra.mxu0 %v754
    %796 = vmatprep.subr.mxu0 0.0
    %797 = vmatpush1.msra.mxu0 %v755
    %798 = vmatprep.subr.mxu0 0.0
    %799 = vmatpush1.msra.mxu0 %v756
    %800 = vmatprep.subr.mxu0 0.0
    %801 = vmatpush1.msra.mxu0 %v757
    %802 = vmatprep.subr.mxu0 0.0
    %803 = vmatpush1.msra.mxu0 %v758
    %804 = vmatprep.subr.mxu0 0.0
    %805 = vmatpush1.msra.mxu0 %v759
    %806 = vmatprep.subr.mxu0 0.0
    %807 = vmatpush1.msra.mxu0 %v760
    %808 = vmatprep.subr.mxu0 0.0
    %809 = vmatpush1.msra.mxu0 %v761
    %810 = vmatprep.subr.mxu0 0.0
    %811 = vmatpush1.msra.mxu0 %v762
    %812 = vmatprep.subr.mxu0 0.0
    %813 = vmatpush1.msra.mxu0 %v763
    %814 = vmatprep.subr.mxu0 0.0
    %815 = vmatpush1.msra.mxu0 %v764
    %816 = vmatprep.subr.mxu0 0.0
    %817 = vmatpush1.msra.mxu0 %v765
    %818 = vmatprep.subr.mxu0 0.0
    %819 = vmatpush1.msra.mxu0 %v766
    %820 = vmatprep.subr.mxu0 0.0
    %821 = vmatpush1.msra.mxu0 %v767
    %822 = vmatprep.subr.mxu0 0.0
    %823 = vmatpush1.msra.mxu0 %v768
    %824 = vmatprep.subr.mxu0 0.0
    %825 = vmatpush1.msra.mxu0 %v769
    %826 = vmatprep.subr.mxu0 0.0
    %827 = vmatpush1.msra.mxu0 %v770
    %828 = vmatprep.subr.mxu0 0.0
    %829 = vmatpush1.msra.mxu0 %v771
    %830 = vmatprep.subr.mxu0 0.0
    %831 = vmatpush1.msra.mxu0 %v772
    %832 = vmatprep.subr.mxu0 0.0
    %833 = vmatpush1.msra.mxu0 %v773
    %834 = vmatprep.subr.mxu0 0.0
    %835 = vmatpush1.msra.mxu0 %v774
    %836 = vmatprep.subr.mxu0 0.0
    %837 = vmatpush1.msra.mxu0 %v775
    %838 = vmatprep.subr.mxu0 0.0
    %839 = vmatpush1.msra.mxu0 %v776
    %840 = vmatprep.subr.mxu0 0.0
    %841 = vmatpush1.msra.mxu0 %v777
    %842 = vmatprep.subr.mxu0 0.0
    %843 = vmatpush1.msra.mxu0 %v778
    %844 = vmatprep.subr.mxu0 0.0
    %845 = vmatpush1.msra.mxu0 %v779
    %846 = vmatprep.subr.mxu0 0.0
    %847 = vmatpush1.msra.mxu0 %v780
    %848 = vmatprep.subr.mxu0 0.0
    %849 = vmatpush1.msra.mxu0 %v781
    %850 = vmatprep.mubr.f32.mxu0 %v783
    %851 = vmatmul.mubr.f32.gmra.mrb[0].mxu0 %v782
    %v852 = vpop.f32.mrb[0].mxu0
    %v853 = vadd.f32 0.0, %v852
    %v854 = vpop.f32.mrb[0].mxu0
    %855 = vdwg.mxu0
    %v856 = vadd.f32 %v748, %v853
    %s857 = scalar_lea.vmem %s3, 1536
    %v858 = vld [vmem:[%s857] sm:$0xff]
    %v859 = vld [vmem:[%s857 + $0x8] sm:$0xff]
    %v860 = vld [vmem:[%s857 + $0x10] sm:$0xff]
    %v861 = vld [vmem:[%s857 + $0x18] sm:$0xff]
    %v862 = vld [vmem:[%s857 + $0x20] sm:$0xff]
    %v863 = vld [vmem:[%s857 + $0x28] sm:$0xff]
    %v864 = vld [vmem:[%s857 + $0x30] sm:$0xff]
    %v865 = vld [vmem:[%s857 + $0x38] sm:$0xff]
    %v866 = vld [vmem:[%s857 + $0x40] sm:$0xff]
    %v867 = vld [vmem:[%s857 + $0x48] sm:$0xff]
    %v868 = vld [vmem:[%s857 + $0x50] sm:$0xff]
    %v869 = vld [vmem:[%s857 + $0x58] sm:$0xff]
    %v870 = vld [vmem:[%s857 + $0x60] sm:$0xff]
    %v871 = vld [vmem:[%s857 + $0x68] sm:$0xff]
    %v872 = vld [vmem:[%s857 + $0x70] sm:$0xff]
    %v873 = vld [vmem:[%s857 + $0x78] sm:$0xff]
    %v874 = vld [vmem:[%s857 + $0x80] sm:$0xff]
    %v875 = vld [vmem:[%s857 + $0x88] sm:$0xff]
    %v876 = vld [vmem:[%s857 + $0x90] sm:$0xff]
    %v877 = vld [vmem:[%s857 + $0x98] sm:$0xff]
    %v878 = vld [vmem:[%s857 + $0xa0] sm:$0xff]
    %v879 = vld [vmem:[%s857 + $0xa8] sm:$0xff]
    %v880 = vld [vmem:[%s857 + $0xb0] sm:$0xff]
    %v881 = vld [vmem:[%s857 + $0xb8] sm:$0xff]
    %v882 = vld [vmem:[%s857 + $0xc0] sm:$0xff]
    %v883 = vld [vmem:[%s857 + $0xc8] sm:$0xff]
    %v884 = vld [vmem:[%s857 + $0xd0] sm:$0xff]
    %v885 = vld [vmem:[%s857 + $0xd8] sm:$0xff]
    %v886 = vld [vmem:[%s857 + $0xe0] sm:$0xff]
    %v887 = vld [vmem:[%s857 + $0xe8] sm:$0xff]
    %v888 = vld [vmem:[%s857 + $0xf0] sm:$0xff]
    %v889 = vld [vmem:[%s857 + $0xf8] sm:$0xff]
    %v890 = vrot.slane %v207, 6
    %v891 = vrot.slane %v208, 6
    %894 = vmatprep.subr.mxu0 0.0
    %895 = vmatpush1.msra.mxu0 %v858
    %896 = vmatprep.subr.mxu0 0.0
    %897 = vmatpush1.msra.mxu0 %v859
    %898 = vmatprep.subr.mxu0 0.0
    %899 = vmatpush1.msra.mxu0 %v860
    %900 = vmatprep.subr.mxu0 0.0
    %901 = vmatpush1.msra.mxu0 %v861
    %902 = vmatprep.subr.mxu0 0.0
    %903 = vmatpush1.msra.mxu0 %v862
    %904 = vmatprep.subr.mxu0 0.0
    %905 = vmatpush1.msra.mxu0 %v863
    %906 = vmatprep.subr.mxu0 0.0
    %907 = vmatpush1.msra.mxu0 %v864
    %908 = vmatprep.subr.mxu0 0.0
    %909 = vmatpush1.msra.mxu0 %v865
    %910 = vmatprep.subr.mxu0 0.0
    %911 = vmatpush1.msra.mxu0 %v866
    %912 = vmatprep.subr.mxu0 0.0
    %913 = vmatpush1.msra.mxu0 %v867
    %914 = vmatprep.subr.mxu0 0.0
    %915 = vmatpush1.msra.mxu0 %v868
    %916 = vmatprep.subr.mxu0 0.0
    %917 = vmatpush1.msra.mxu0 %v869
    %918 = vmatprep.subr.mxu0 0.0
    %919 = vmatpush1.msra.mxu0 %v870
    %920 = vmatprep.subr.mxu0 0.0
    %921 = vmatpush1.msra.mxu0 %v871
    %922 = vmatprep.subr.mxu0 0.0
    %923 = vmatpush1.msra.mxu0 %v872
    %924 = vmatprep.subr.mxu0 0.0
    %925 = vmatpush1.msra.mxu0 %v873
    %926 = vmatprep.subr.mxu0 0.0
    %927 = vmatpush1.msra.mxu0 %v874
    %928 = vmatprep.subr.mxu0 0.0
    %929 = vmatpush1.msra.mxu0 %v875
    %930 = vmatprep.subr.mxu0 0.0
    %931 = vmatpush1.msra.mxu0 %v876
    %932 = vmatprep.subr.mxu0 0.0
    %933 = vmatpush1.msra.mxu0 %v877
    %934 = vmatprep.subr.mxu0 0.0
    %935 = vmatpush1.msra.mxu0 %v878
    %936 = vmatprep.subr.mxu0 0.0
    %937 = vmatpush1.msra.mxu0 %v879
    %938 = vmatprep.subr.mxu0 0.0
    %939 = vmatpush1.msra.mxu0 %v880
    %940 = vmatprep.subr.mxu0 0.0
    %941 = vmatpush1.msra.mxu0 %v881
    %942 = vmatprep.subr.mxu0 0.0
    %943 = vmatpush1.msra.mxu0 %v882
    %944 = vmatprep.subr.mxu0 0.0
    %945 = vmatpush1.msra.mxu0 %v883
    %946 = vmatprep.subr.mxu0 0.0
    %947 = vmatpush1.msra.mxu0 %v884
    %948 = vmatprep.subr.mxu0 0.0
    %949 = vmatpush1.msra.mxu0 %v885
    %950 = vmatprep.subr.mxu0 0.0
    %951 = vmatpush1.msra.mxu0 %v886
    %952 = vmatprep.subr.mxu0 0.0
    %953 = vmatpush1.msra.mxu0 %v887
    %954 = vmatprep.subr.mxu0 0.0
    %955 = vmatpush1.msra.mxu0 %v888
    %956 = vmatprep.subr.mxu0 0.0
    %957 = vmatpush1.msra.mxu0 %v889
    %958 = vmatprep.mubr.f32.mxu0 %v891
    %959 = vmatmul.mubr.f32.gmra.mrb[0].mxu0 %v890
    %v960 = vpop.f32.mrb[0].mxu0
    %v961 = vadd.f32 0.0, %v960
    %v962 = vpop.f32.mrb[0].mxu0
    %963 = vdwg.mxu0
    %v964 = vadd.f32 %v856, %v961
    %s965 = scalar_lea.vmem %s3, 1792
    %v966 = vld [vmem:[%s965] sm:$0xff]
    %v967 = vld [vmem:[%s965 + $0x8] sm:$0xff]
    %v968 = vld [vmem:[%s965 + $0x10] sm:$0xff]
    %v969 = vld [vmem:[%s965 + $0x18] sm:$0xff]
    %v970 = vld [vmem:[%s965 + $0x20] sm:$0xff]
    %v971 = vld [vmem:[%s965 + $0x28] sm:$0xff]
    %v972 = vld [vmem:[%s965 + $0x30] sm:$0xff]
    %v973 = vld [vmem:[%s965 + $0x38] sm:$0xff]
    %v974 = vld [vmem:[%s965 + $0x40] sm:$0xff]
    %v975 = vld [vmem:[%s965 + $0x48] sm:$0xff]
    %v976 = vld [vmem:[%s965 + $0x50] sm:$0xff]
    %v977 = vld [vmem:[%s965 + $0x58] sm:$0xff]
    %v978 = vld [vmem:[%s965 + $0x60] sm:$0xff]
    %v979 = vld [vmem:[%s965 + $0x68] sm:$0xff]
    %v980 = vld [vmem:[%s965 + $0x70] sm:$0xff]
    %v981 = vld [vmem:[%s965 + $0x78] sm:$0xff]
    %v982 = vld [vmem:[%s965 + $0x80] sm:$0xff]
    %v983 = vld [vmem:[%s965 + $0x88] sm:$0xff]
    %v984 = vld [vmem:[%s965 + $0x90] sm:$0xff]
    %v985 = vld [vmem:[%s965 + $0x98] sm:$0xff]
    %v986 = vld [vmem:[%s965 + $0xa0] sm:$0xff]
    %v987 = vld [vmem:[%s965 + $0xa8] sm:$0xff]
    %v988 = vld [vmem:[%s965 + $0xb0] sm:$0xff]
    %v989 = vld [vmem:[%s965 + $0xb8] sm:$0xff]
    %v990 = vld [vmem:[%s965 + $0xc0] sm:$0xff]
    %v991 = vld [vmem:[%s965 + $0xc8] sm:$0xff]
    %v992 = vld [vmem:[%s965 + $0xd0] sm:$0xff]
    %v993 = vld [vmem:[%s965 + $0xd8] sm:$0xff]
    %v994 = vld [vmem:[%s965 + $0xe0] sm:$0xff]
    %v995 = vld [vmem:[%s965 + $0xe8] sm:$0xff]
    %v996 = vld [vmem:[%s965 + $0xf0] sm:$0xff]
    %v997 = vld [vmem:[%s965 + $0xf8] sm:$0xff]
    %v998 = vrot.slane %v207, 7
    %v999 = vrot.slane %v208, 7
    %1002 = vmatprep.subr.mxu0 0.0
    %1003 = vmatpush1.msra.mxu0 %v966
    %1004 = vmatprep.subr.mxu0 0.0
    %1005 = vmatpush1.msra.mxu0 %v967
    %1006 = vmatprep.subr.mxu0 0.0
    %1007 = vmatpush1.msra.mxu0 %v968
    %1008 = vmatprep.subr.mxu0 0.0
    %1009 = vmatpush1.msra.mxu0 %v969
    %1010 = vmatprep.subr.mxu0 0.0
    %1011 = vmatpush1.msra.mxu0 %v970
    %1012 = vmatprep.subr.mxu0 0.0
    %1013 = vmatpush1.msra.mxu0 %v971
    %1014 = vmatprep.subr.mxu0 0.0
    %1015 = vmatpush1.msra.mxu0 %v972
    %1016 = vmatprep.subr.mxu0 0.0
    %1017 = vmatpush1.msra.mxu0 %v973
    %1018 = vmatprep.subr.mxu0 0.0
    %1019 = vmatpush1.msra.mxu0 %v974
    %1020 = vmatprep.subr.mxu0 0.0
    %1021 = vmatpush1.msra.mxu0 %v975
    %1022 = vmatprep.subr.mxu0 0.0
    %1023 = vmatpush1.msra.mxu0 %v976
    %1024 = vmatprep.subr.mxu0 0.0
    %1025 = vmatpush1.msra.mxu0 %v977
    %1026 = vmatprep.subr.mxu0 0.0
    %1027 = vmatpush1.msra.mxu0 %v978
    %1028 = vmatprep.subr.mxu0 0.0
    %1029 = vmatpush1.msra.mxu0 %v979
    %1030 = vmatprep.subr.mxu0 0.0
    %1031 = vmatpush1.msra.mxu0 %v980
    %1032 = vmatprep.subr.mxu0 0.0
    %1033 = vmatpush1.msra.mxu0 %v981
    %1034 = vmatprep.subr.mxu0 0.0
    %1035 = vmatpush1.msra.mxu0 %v982
    %1036 = vmatprep.subr.mxu0 0.0
    %1037 = vmatpush1.msra.mxu0 %v983
    %1038 = vmatprep.subr.mxu0 0.0
    %1039 = vmatpush1.msra.mxu0 %v984
    %1040 = vmatprep.subr.mxu0 0.0
    %1041 = vmatpush1.msra.mxu0 %v985
    %1042 = vmatprep.subr.mxu0 0.0
    %1043 = vmatpush1.msra.mxu0 %v986
    %1044 = vmatprep.subr.mxu0 0.0
    %1045 = vmatpush1.msra.mxu0 %v987
    %1046 = vmatprep.subr.mxu0 0.0
    %1047 = vmatpush1.msra.mxu0 %v988
    %1048 = vmatprep.subr.mxu0 0.0
    %1049 = vmatpush1.msra.mxu0 %v989
    %1050 = vmatprep.subr.mxu0 0.0
    %1051 = vmatpush1.msra.mxu0 %v990
    %1052 = vmatprep.subr.mxu0 0.0
    %1053 = vmatpush1.msra.mxu0 %v991
    %1054 = vmatprep.subr.mxu0 0.0
    %1055 = vmatpush1.msra.mxu0 %v992
    %1056 = vmatprep.subr.mxu0 0.0
    %1057 = vmatpush1.msra.mxu0 %v993
    %1058 = vmatprep.subr.mxu0 0.0
    %1059 = vmatpush1.msra.mxu0 %v994
    %1060 = vmatprep.subr.mxu0 0.0
    %1061 = vmatpush1.msra.mxu0 %v995
    %1062 = vmatprep.subr.mxu0 0.0
    %1063 = vmatpush1.msra.mxu0 %v996
    %1064 = vmatprep.subr.mxu0 0.0
    %1065 = vmatpush1.msra.mxu0 %v997
    %1066 = vmatprep.mubr.f32.mxu0 %v999
    %1067 = vmatmul.mubr.f32.gmra.mrb[0].mxu0 %v998
    %v1068 = vpop.f32.mrb[0].mxu0
    %v1069 = vadd.f32 0.0, %v1068
    %v1070 = vpop.f32.mrb[0].mxu0
    %1071 = vdwg.mxu0
    %v1072 = vadd.f32 %v964, %v1069
    %1073 = vmatprep.subr.mxu0 0.0
    %1074 = vmatpush1.msra.mxu0 %v212
    %1075 = vmatprep.subr.mxu0 0.0
    %1076 = vmatpush1.msra.mxu0 %v213
    %1077 = vmatprep.subr.mxu0 0.0
    %1078 = vmatpush1.msra.mxu0 %v214
    %1079 = vmatprep.subr.mxu0 0.0
    %1080 = vmatpush1.msra.mxu0 %v215
    %1081 = vmatprep.subr.mxu0 0.0
    %1082 = vmatpush1.msra.mxu0 %v216
    %1083 = vmatprep.subr.mxu0 0.0
    %1084 = vmatpush1.msra.mxu0 %v217
    %1085 = vmatprep.subr.mxu0 0.0
    %1086 = vmatpush1.msra.mxu0 %v218
    %1087 = vmatprep.subr.mxu0 0.0
    %1088 = vmatpush1.msra.mxu0 %v219
    %1089 = vmatprep.subr.mxu0 0.0
    %1090 = vmatpush1.msra.mxu0 %v220
    %1091 = vmatprep.subr.mxu0 0.0
    %1092 = vmatpush1.msra.mxu0 %v221
    %1093 = vmatprep.subr.mxu0 0.0
    %1094 = vmatpush1.msra.mxu0 %v222
    %1095 = vmatprep.subr.mxu0 0.0
    %1096 = vmatpush1.msra.mxu0 %v223
    %1097 = vmatprep.subr.mxu0 0.0
    %1098 = vmatpush1.msra.mxu0 %v224
    %1099 = vmatprep.subr.mxu0 0.0
    %1100 = vmatpush1.msra.mxu0 %v225
    %1101 = vmatprep.subr.mxu0 0.0
    %1102 = vmatpush1.msra.mxu0 %v226
    %1103 = vmatprep.subr.mxu0 0.0
    %1104 = vmatpush1.msra.mxu0 %v227
    %1105 = vmatprep.subr.mxu0 0.0
    %1106 = vmatpush1.msra.mxu0 %v228
    %1107 = vmatprep.subr.mxu0 0.0
    %1108 = vmatpush1.msra.mxu0 %v229
    %1109 = vmatprep.subr.mxu0 0.0
    %1110 = vmatpush1.msra.mxu0 %v230
    %1111 = vmatprep.subr.mxu0 0.0
    %1112 = vmatpush1.msra.mxu0 %v231
    %1113 = vmatprep.subr.mxu0 0.0
    %1114 = vmatpush1.msra.mxu0 %v232
    %1115 = vmatprep.subr.mxu0 0.0
    %1116 = vmatpush1.msra.mxu0 %v233
    %1117 = vmatprep.subr.mxu0 0.0
    %1118 = vmatpush1.msra.mxu0 %v234
    %1119 = vmatprep.subr.mxu0 0.0
    %1120 = vmatpush1.msra.mxu0 %v235
    %1121 = vmatprep.subr.mxu0 0.0
    %1122 = vmatpush1.msra.mxu0 %v236
    %1123 = vmatprep.subr.mxu0 0.0
    %1124 = vmatpush1.msra.mxu0 %v237
    %1125 = vmatprep.subr.mxu0 0.0
    %1126 = vmatpush1.msra.mxu0 %v238
    %1127 = vmatprep.subr.mxu0 0.0
    %1128 = vmatpush1.msra.mxu0 %v239
    %1129 = vmatprep.subr.mxu0 0.0
    %1130 = vmatpush1.msra.mxu0 %v240
    %1131 = vmatprep.subr.mxu0 0.0
    %1132 = vmatpush1.msra.mxu0 %v241
    %1133 = vmatprep.subr.mxu0 0.0
    %1134 = vmatpush1.msra.mxu0 %v242
    %1135 = vmatprep.subr.mxu0 0.0
    %1136 = vmatpush1.msra.mxu0 %v243
    %1137 = vmatprep.mubr.f32.mxu0 %v210
    %1138 = vmatmul.mubr.f32.gmra.mrb[0].mxu0 %v209
    %v1139 = vpop.f32.mrb[0].mxu0
    %v1140 = vadd.f32 0.0, %v1139
    %v1141 = vpop.f32.mrb[0].mxu0
    %1142 = vdwg.mxu0
    %v1143 = vadd.f32 %v211, %v1140
    %v1146 = vrot.slane %v209, 1
    %v1147 = vrot.slane %v210, 1
    %1150 = vmatprep.subr.mxu0 0.0
    %1151 = vmatpush1.msra.mxu0 %v316
    %1152 = vmatprep.subr.mxu0 0.0
    %1153 = vmatpush1.msra.mxu0 %v317
    %1154 = vmatprep.subr.mxu0 0.0
    %1155 = vmatpush1.msra.mxu0 %v318
    %1156 = vmatprep.subr.mxu0 0.0
    %1157 = vmatpush1.msra.mxu0 %v319
    %1158 = vmatprep.subr.mxu0 0.0
    %1159 = vmatpush1.msra.mxu0 %v320
    %1160 = vmatprep.subr.mxu0 0.0
    %1161 = vmatpush1.msra.mxu0 %v321
    %1162 = vmatprep.subr.mxu0 0.0
    %1163 = vmatpush1.msra.mxu0 %v322
    %1164 = vmatprep.subr.mxu0 0.0
    %1165 = vmatpush1.msra.mxu0 %v323
    %1166 = vmatprep.subr.mxu0 0.0
    %1167 = vmatpush1.msra.mxu0 %v324
    %1168 = vmatprep.subr.mxu0 0.0
    %1169 = vmatpush1.msra.mxu0 %v325
    %1170 = vmatprep.subr.mxu0 0.0
    %1171 = vmatpush1.msra.mxu0 %v326
    %1172 = vmatprep.subr.mxu0 0.0
    %1173 = vmatpush1.msra.mxu0 %v327
    %1174 = vmatprep.subr.mxu0 0.0
    %1175 = vmatpush1.msra.mxu0 %v328
    %1176 = vmatprep.subr.mxu0 0.0
    %1177 = vmatpush1.msra.mxu0 %v329
    %1178 = vmatprep.subr.mxu0 0.0
    %1179 = vmatpush1.msra.mxu0 %v330
    %1180 = vmatprep.subr.mxu0 0.0
    %1181 = vmatpush1.msra.mxu0 %v331
    %1182 = vmatprep.subr.mxu0 0.0
    %1183 = vmatpush1.msra.mxu0 %v332
    %1184 = vmatprep.subr.mxu0 0.0
    %1185 = vmatpush1.msra.mxu0 %v333
    %1186 = vmatprep.subr.mxu0 0.0
    %1187 = vmatpush1.msra.mxu0 %v334
    %1188 = vmatprep.subr.mxu0 0.0
    %1189 = vmatpush1.msra.mxu0 %v335
    %1190 = vmatprep.subr.mxu0 0.0
    %1191 = vmatpush1.msra.mxu0 %v336
    %1192 = vmatprep.subr.mxu0 0.0
    %1193 = vmatpush1.msra.mxu0 %v337
    %1194 = vmatprep.subr.mxu0 0.0
    %1195 = vmatpush1.msra.mxu0 %v338
    %1196 = vmatprep.subr.mxu0 0.0
    %1197 = vmatpush1.msra.mxu0 %v339
    %1198 = vmatprep.subr.mxu0 0.0
    %1199 = vmatpush1.msra.mxu0 %v340
    %1200 = vmatprep.subr.mxu0 0.0
    %1201 = vmatpush1.msra.mxu0 %v341
    %1202 = vmatprep.subr.mxu0 0.0
    %1203 = vmatpush1.msra.mxu0 %v342
    %1204 = vmatprep.subr.mxu0 0.0
    %1205 = vmatpush1.msra.mxu0 %v343
    %1206 = vmatprep.subr.mxu0 0.0
    %1207 = vmatpush1.msra.mxu0 %v344
    %1208 = vmatprep.subr.mxu0 0.0
    %1209 = vmatpush1.msra.mxu0 %v345
    %1210 = vmatprep.subr.mxu0 0.0
    %1211 = vmatpush1.msra.mxu0 %v346
    %1212 = vmatprep.subr.mxu0 0.0
    %1213 = vmatpush1.msra.mxu0 %v347
    %1214 = vmatprep.mubr.f32.mxu0 %v1147
    %1215 = vmatmul.mubr.f32.gmra.mrb[0].mxu0 %v1146
    %v1216 = vpop.f32.mrb[0].mxu0
    %v1217 = vadd.f32 0.0, %v1216
    %v1218 = vpop.f32.mrb[0].mxu0
    %1219 = vdwg.mxu0
    %v1220 = vadd.f32 %v1143, %v1217
    %v1221 = vrot.slane %v209, 2
    %v1222 = vrot.slane %v210, 2
    %1225 = vmatprep.subr.mxu0 0.0
    %1226 = vmatpush1.msra.mxu0 %v426
    %1227 = vmatprep.subr.mxu0 0.0
    %1228 = vmatpush1.msra.mxu0 %v427
    %1229 = vmatprep.subr.mxu0 0.0
    %1230 = vmatpush1.msra.mxu0 %v428
    %1231 = vmatprep.subr.mxu0 0.0
    %1232 = vmatpush1.msra.mxu0 %v429
    %1233 = vmatprep.subr.mxu0 0.0
    %1234 = vmatpush1.msra.mxu0 %v430
    %1235 = vmatprep.subr.mxu0 0.0
    %1236 = vmatpush1.msra.mxu0 %v431
    %1237 = vmatprep.subr.mxu0 0.0
    %1238 = vmatpush1.msra.mxu0 %v432
    %1239 = vmatprep.subr.mxu0 0.0
    %1240 = vmatpush1.msra.mxu0 %v433
    %1241 = vmatprep.subr.mxu0 0.0
    %1242 = vmatpush1.msra.mxu0 %v434
    %1243 = vmatprep.subr.mxu0 0.0
    %1244 = vmatpush1.msra.mxu0 %v435
    %1245 = vmatprep.subr.mxu0 0.0
    %1246 = vmatpush1.msra.mxu0 %v436
    %1247 = vmatprep.subr.mxu0 0.0
    %1248 = vmatpush1.msra.mxu0 %v437
    %1249 = vmatprep.subr.mxu0 0.0
    %1250 = vmatpush1.msra.mxu0 %v438
    %1251 = vmatprep.subr.mxu0 0.0
    %1252 = vmatpush1.msra.mxu0 %v439
    %1253 = vmatprep.subr.mxu0 0.0
    %1254 = vmatpush1.msra.mxu0 %v440
    %1255 = vmatprep.subr.mxu0 0.0
    %1256 = vmatpush1.msra.mxu0 %v441
    %1257 = vmatprep.subr.mxu0 0.0
    %1258 = vmatpush1.msra.mxu0 %v442
    %1259 = vmatprep.subr.mxu0 0.0
    %1260 = vmatpush1.msra.mxu0 %v443
    %1261 = vmatprep.subr.mxu0 0.0
    %1262 = vmatpush1.msra.mxu0 %v444
    %1263 = vmatprep.subr.mxu0 0.0
    %1264 = vmatpush1.msra.mxu0 %v445
    %1265 = vmatprep.subr.mxu0 0.0
    %1266 = vmatpush1.msra.mxu0 %v446
    %1267 = vmatprep.subr.mxu0 0.0
    %1268 = vmatpush1.msra.mxu0 %v447
    %1269 = vmatprep.subr.mxu0 0.0
    %1270 = vmatpush1.msra.mxu0 %v448
    %1271 = vmatprep.subr.mxu0 0.0
    %1272 = vmatpush1.msra.mxu0 %v449
    %1273 = vmatprep.subr.mxu0 0.0
    %1274 = vmatpush1.msra.mxu0 %v450
    %1275 = vmatprep.subr.mxu0 0.0
    %1276 = vmatpush1.msra.mxu0 %v451
    %1277 = vmatprep.subr.mxu0 0.0
    %1278 = vmatpush1.msra.mxu0 %v452
    %1279 = vmatprep.subr.mxu0 0.0
    %1280 = vmatpush1.msra.mxu0 %v453
    %1281 = vmatprep.subr.mxu0 0.0
    %1282 = vmatpush1.msra.mxu0 %v454
    %1283 = vmatprep.subr.mxu0 0.0
    %1284 = vmatpush1.msra.mxu0 %v455
    %1285 = vmatprep.subr.mxu0 0.0
    %1286 = vmatpush1.msra.mxu0 %v456
    %1287 = vmatprep.subr.mxu0 0.0
    %1288 = vmatpush1.msra.mxu0 %v457
    %1289 = vmatprep.mubr.f32.mxu0 %v1222
    %1290 = vmatmul.mubr.f32.gmra.mrb[0].mxu0 %v1221
    %v1291 = vpop.f32.mrb[0].mxu0
    %v1292 = vadd.f32 0.0, %v1291
    %v1293 = vpop.f32.mrb[0].mxu0
    %1294 = vdwg.mxu0
    %v1295 = vadd.f32 %v1220, %v1292
    %v1296 = vrot.slane %v209, 3
    %v1297 = vrot.slane %v210, 3
    %1300 = vmatprep.subr.mxu0 0.0
    %1301 = vmatpush1.msra.mxu0 %v534
    %1302 = vmatprep.subr.mxu0 0.0
    %1303 = vmatpush1.msra.mxu0 %v535
    %1304 = vmatprep.subr.mxu0 0.0
    %1305 = vmatpush1.msra.mxu0 %v536
    %1306 = vmatprep.subr.mxu0 0.0
    %1307 = vmatpush1.msra.mxu0 %v537
    %1308 = vmatprep.subr.mxu0 0.0
    %1309 = vmatpush1.msra.mxu0 %v538
    %1310 = vmatprep.subr.mxu0 0.0
    %1311 = vmatpush1.msra.mxu0 %v539
    %1312 = vmatprep.subr.mxu0 0.0
    %1313 = vmatpush1.msra.mxu0 %v540
    %1314 = vmatprep.subr.mxu0 0.0
    %1315 = vmatpush1.msra.mxu0 %v541
    %1316 = vmatprep.subr.mxu0 0.0
    %1317 = vmatpush1.msra.mxu0 %v542
    %1318 = vmatprep.subr.mxu0 0.0
    %1319 = vmatpush1.msra.mxu0 %v543
    %1320 = vmatprep.subr.mxu0 0.0
    %1321 = vmatpush1.msra.mxu0 %v544
    %1322 = vmatprep.subr.mxu0 0.0
    %1323 = vmatpush1.msra.mxu0 %v545
    %1324 = vmatprep.subr.mxu0 0.0
    %1325 = vmatpush1.msra.mxu0 %v546
    %1326 = vmatprep.subr.mxu0 0.0
    %1327 = vmatpush1.msra.mxu0 %v547
    %1328 = vmatprep.subr.mxu0 0.0
    %1329 = vmatpush1.msra.mxu0 %v548
    %1330 = vmatprep.subr.mxu0 0.0
    %1331 = vmatpush1.msra.mxu0 %v549
    %1332 = vmatprep.subr.mxu0 0.0
    %1333 = vmatpush1.msra.mxu0 %v550
    %1334 = vmatprep.subr.mxu0 0.0
    %1335 = vmatpush1.msra.mxu0 %v551
    %1336 = vmatprep.subr.mxu0 0.0
    %1337 = vmatpush1.msra.mxu0 %v552
    %1338 = vmatprep.subr.mxu0 0.0
    %1339 = vmatpush1.msra.mxu0 %v553
    %1340 = vmatprep.subr.mxu0 0.0
    %1341 = vmatpush1.msra.mxu0 %v554
    %1342 = vmatprep.subr.mxu0 0.0
    %1343 = vmatpush1.msra.mxu0 %v555
    %1344 = vmatprep.subr.mxu0 0.0
    %1345 = vmatpush1.msra.mxu0 %v556
    %1346 = vmatprep.subr.mxu0 0.0
    %1347 = vmatpush1.msra.mxu0 %v557
    %1348 = vmatprep.subr.mxu0 0.0
    %1349 = vmatpush1.msra.mxu0 %v558
    %1350 = vmatprep.subr.mxu0 0.0
    %1351 = vmatpush1.msra.mxu0 %v559
    %1352 = vmatprep.subr.mxu0 0.0
    %1353 = vmatpush1.msra.mxu0 %v560
    %1354 = vmatprep.subr.mxu0 0.0
    %1355 = vmatpush1.msra.mxu0 %v561
    %1356 = vmatprep.subr.mxu0 0.0
    %1357 = vmatpush1.msra.mxu0 %v562
    %1358 = vmatprep.subr.mxu0 0.0
    %1359 = vmatpush1.msra.mxu0 %v563
    %1360 = vmatprep.subr.mxu0 0.0
    %1361 = vmatpush1.msra.mxu0 %v564
    %1362 = vmatprep.subr.mxu0 0.0
    %1363 = vmatpush1.msra.mxu0 %v565
    %1364 = vmatprep.mubr.f32.mxu0 %v1297
    %1365 = vmatmul.mubr.f32.gmra.mrb[0].mxu0 %v1296
    %v1366 = vpop.f32.mrb[0].mxu0
    %v1367 = vadd.f32 0.0, %v1366
    %v1368 = vpop.f32.mrb[0].mxu0
    %1369 = vdwg.mxu0
    %v1370 = vadd.f32 %v1295, %v1367
    %v1371 = vrot.slane %v209, 4
    %v1372 = vrot.slane %v210, 4
    %1375 = vmatprep.subr.mxu0 0.0
    %1376 = vmatpush1.msra.mxu0 %v642
    %1377 = vmatprep.subr.mxu0 0.0
    %1378 = vmatpush1.msra.mxu0 %v643
    %1379 = vmatprep.subr.mxu0 0.0
    %1380 = vmatpush1.msra.mxu0 %v644
    %1381 = vmatprep.subr.mxu0 0.0
    %1382 = vmatpush1.msra.mxu0 %v645
    %1383 = vmatprep.subr.mxu0 0.0
    %1384 = vmatpush1.msra.mxu0 %v646
    %1385 = vmatprep.subr.mxu0 0.0
    %1386 = vmatpush1.msra.mxu0 %v647
    %1387 = vmatprep.subr.mxu0 0.0
    %1388 = vmatpush1.msra.mxu0 %v648
    %1389 = vmatprep.subr.mxu0 0.0
    %1390 = vmatpush1.msra.mxu0 %v649
    %1391 = vmatprep.subr.mxu0 0.0
    %1392 = vmatpush1.msra.mxu0 %v650
    %1393 = vmatprep.subr.mxu0 0.0
    %1394 = vmatpush1.msra.mxu0 %v651
    %1395 = vmatprep.subr.mxu0 0.0
    %1396 = vmatpush1.msra.mxu0 %v652
    %1397 = vmatprep.subr.mxu0 0.0
    %1398 = vmatpush1.msra.mxu0 %v653
    %1399 = vmatprep.subr.mxu0 0.0
    %1400 = vmatpush1.msra.mxu0 %v654
    %1401 = vmatprep.subr.mxu0 0.0
    %1402 = vmatpush1.msra.mxu0 %v655
    %1403 = vmatprep.subr.mxu0 0.0
    %1404 = vmatpush1.msra.mxu0 %v656
    %1405 = vmatprep.subr.mxu0 0.0
    %1406 = vmatpush1.msra.mxu0 %v657
    %1407 = vmatprep.subr.mxu0 0.0
    %1408 = vmatpush1.msra.mxu0 %v658
    %1409 = vmatprep.subr.mxu0 0.0
    %1410 = vmatpush1.msra.mxu0 %v659
    %1411 = vmatprep.subr.mxu0 0.0
    %1412 = vmatpush1.msra.mxu0 %v660
    %1413 = vmatprep.subr.mxu0 0.0
    %1414 = vmatpush1.msra.mxu0 %v661
    %1415 = vmatprep.subr.mxu0 0.0
    %1416 = vmatpush1.msra.mxu0 %v662
    %1417 = vmatprep.subr.mxu0 0.0
    %1418 = vmatpush1.msra.mxu0 %v663
    %1419 = vmatprep.subr.mxu0 0.0
    %1420 = vmatpush1.msra.mxu0 %v664
    %1421 = vmatprep.subr.mxu0 0.0
    %1422 = vmatpush1.msra.mxu0 %v665
    %1423 = vmatprep.subr.mxu0 0.0
    %1424 = vmatpush1.msra.mxu0 %v666
    %1425 = vmatprep.subr.mxu0 0.0
    %1426 = vmatpush1.msra.mxu0 %v667
    %1427 = vmatprep.subr.mxu0 0.0
    %1428 = vmatpush1.msra.mxu0 %v668
    %1429 = vmatprep.subr.mxu0 0.0
    %1430 = vmatpush1.msra.mxu0 %v669
    %1431 = vmatprep.subr.mxu0 0.0
    %1432 = vmatpush1.msra.mxu0 %v670
    %1433 = vmatprep.subr.mxu0 0.0
    %1434 = vmatpush1.msra.mxu0 %v671
    %1435 = vmatprep.subr.mxu0 0.0
    %1436 = vmatpush1.msra.mxu0 %v672
    %1437 = vmatprep.subr.mxu0 0.0
    %1438 = vmatpush1.msra.mxu0 %v673
    %1439 = vmatprep.mubr.f32.mxu0 %v1372
    %1440 = vmatmul.mubr.f32.gmra.mrb[0].mxu0 %v1371
    %v1441 = vpop.f32.mrb[0].mxu0
    %v1442 = vadd.f32 0.0, %v1441
    %v1443 = vpop.f32.mrb[0].mxu0
    %1444 = vdwg.mxu0
    %v1445 = vadd.f32 %v1370, %v1442
    %v1446 = vrot.slane %v209, 5
    %v1447 = vrot.slane %v210, 5
    %1450 = vmatprep.subr.mxu0 0.0
    %1451 = vmatpush1.msra.mxu0 %v750
    %1452 = vmatprep.subr.mxu0 0.0
    %1453 = vmatpush1.msra.mxu0 %v751
    %1454 = vmatprep.subr.mxu0 0.0
    %1455 = vmatpush1.msra.mxu0 %v752
    %1456 = vmatprep.subr.mxu0 0.0
    %1457 = vmatpush1.msra.mxu0 %v753
    %1458 = vmatprep.subr.mxu0 0.0
    %1459 = vmatpush1.msra.mxu0 %v754
    %1460 = vmatprep.subr.mxu0 0.0
    %1461 = vmatpush1.msra.mxu0 %v755
    %1462 = vmatprep.subr.mxu0 0.0
    %1463 = vmatpush1.msra.mxu0 %v756
    %1464 = vmatprep.subr.mxu0 0.0
    %1465 = vmatpush1.msra.mxu0 %v757
    %1466 = vmatprep.subr.mxu0 0.0
    %1467 = vmatpush1.msra.mxu0 %v758
    %1468 = vmatprep.subr.mxu0 0.0
    %1469 = vmatpush1.msra.mxu0 %v759
    %1470 = vmatprep.subr.mxu0 0.0
    %1471 = vmatpush1.msra.mxu0 %v760
    %1472 = vmatprep.subr.mxu0 0.0
    %1473 = vmatpush1.msra.mxu0 %v761
    %1474 = vmatprep.subr.mxu0 0.0
    %1475 = vmatpush1.msra.mxu0 %v762
    %1476 = vmatprep.subr.mxu0 0.0
    %1477 = vmatpush1.msra.mxu0 %v763
    %1478 = vmatprep.subr.mxu0 0.0
    %1479 = vmatpush1.msra.mxu0 %v764
    %1480 = vmatprep.subr.mxu0 0.0
    %1481 = vmatpush1.msra.mxu0 %v765
    %1482 = vmatprep.subr.mxu0 0.0
    %1483 = vmatpush1.msra.mxu0 %v766
    %1484 = vmatprep.subr.mxu0 0.0
    %1485 = vmatpush1.msra.mxu0 %v767
    %1486 = vmatprep.subr.mxu0 0.0
    %1487 = vmatpush1.msra.mxu0 %v768
    %1488 = vmatprep.subr.mxu0 0.0
    %1489 = vmatpush1.msra.mxu0 %v769
    %1490 = vmatprep.subr.mxu0 0.0
    %1491 = vmatpush1.msra.mxu0 %v770
    %1492 = vmatprep.subr.mxu0 0.0
    %1493 = vmatpush1.msra.mxu0 %v771
    %1494 = vmatprep.subr.mxu0 0.0
    %1495 = vmatpush1.msra.mxu0 %v772
    %1496 = vmatprep.subr.mxu0 0.0
    %1497 = vmatpush1.msra.mxu0 %v773
    %1498 = vmatprep.subr.mxu0 0.0
    %1499 = vmatpush1.msra.mxu0 %v774
    %1500 = vmatprep.subr.mxu0 0.0
    %1501 = vmatpush1.msra.mxu0 %v775
    %1502 = vmatprep.subr.mxu0 0.0
    %1503 = vmatpush1.msra.mxu0 %v776
    %1504 = vmatprep.subr.mxu0 0.0
    %1505 = vmatpush1.msra.mxu0 %v777
    %1506 = vmatprep.subr.mxu0 0.0
    %1507 = vmatpush1.msra.mxu0 %v778
    %1508 = vmatprep.subr.mxu0 0.0
    %1509 = vmatpush1.msra.mxu0 %v779
    %1510 = vmatprep.subr.mxu0 0.0
    %1511 = vmatpush1.msra.mxu0 %v780
    %1512 = vmatprep.subr.mxu0 0.0
    %1513 = vmatpush1.msra.mxu0 %v781
    %1514 = vmatprep.mubr.f32.mxu0 %v1447
    %1515 = vmatmul.mubr.f32.gmra.mrb[0].mxu0 %v1446
    %v1516 = vpop.f32.mrb[0].mxu0
    %v1517 = vadd.f32 0.0, %v1516
    %v1518 = vpop.f32.mrb[0].mxu0
    %1519 = vdwg.mxu0
    %v1520 = vadd.f32 %v1445, %v1517
    %v1521 = vrot.slane %v209, 6
    %v1522 = vrot.slane %v210, 6
    %1525 = vmatprep.subr.mxu0 0.0
    %1526 = vmatpush1.msra.mxu0 %v858
    %1527 = vmatprep.subr.mxu0 0.0
    %1528 = vmatpush1.msra.mxu0 %v859
    %1529 = vmatprep.subr.mxu0 0.0
    %1530 = vmatpush1.msra.mxu0 %v860
    %1531 = vmatprep.subr.mxu0 0.0
    %1532 = vmatpush1.msra.mxu0 %v861
    %1533 = vmatprep.subr.mxu0 0.0
    %1534 = vmatpush1.msra.mxu0 %v862
    %1535 = vmatprep.subr.mxu0 0.0
    %1536 = vmatpush1.msra.mxu0 %v863
    %1537 = vmatprep.subr.mxu0 0.0
    %1538 = vmatpush1.msra.mxu0 %v864
    %1539 = vmatprep.subr.mxu0 0.0
    %1540 = vmatpush1.msra.mxu0 %v865
    %1541 = vmatprep.subr.mxu0 0.0
    %1542 = vmatpush1.msra.mxu0 %v866
    %1543 = vmatprep.subr.mxu0 0.0
    %1544 = vmatpush1.msra.mxu0 %v867
    %1545 = vmatprep.subr.mxu0 0.0
    %1546 = vmatpush1.msra.mxu0 %v868
    %1547 = vmatprep.subr.mxu0 0.0
    %1548 = vmatpush1.msra.mxu0 %v869
    %1549 = vmatprep.subr.mxu0 0.0
    %1550 = vmatpush1.msra.mxu0 %v870
    %1551 = vmatprep.subr.mxu0 0.0
    %1552 = vmatpush1.msra.mxu0 %v871
    %1553 = vmatprep.subr.mxu0 0.0
    %1554 = vmatpush1.msra.mxu0 %v872
    %1555 = vmatprep.subr.mxu0 0.0
    %1556 = vmatpush1.msra.mxu0 %v873
    %1557 = vmatprep.subr.mxu0 0.0
    %1558 = vmatpush1.msra.mxu0 %v874
    %1559 = vmatprep.subr.mxu0 0.0
    %1560 = vmatpush1.msra.mxu0 %v875
    %1561 = vmatprep.subr.mxu0 0.0
    %1562 = vmatpush1.msra.mxu0 %v876
    %1563 = vmatprep.subr.mxu0 0.0
    %1564 = vmatpush1.msra.mxu0 %v877
    %1565 = vmatprep.subr.mxu0 0.0
    %1566 = vmatpush1.msra.mxu0 %v878
    %1567 = vmatprep.subr.mxu0 0.0
    %1568 = vmatpush1.msra.mxu0 %v879
    %1569 = vmatprep.subr.mxu0 0.0
    %1570 = vmatpush1.msra.mxu0 %v880
    %1571 = vmatprep.subr.mxu0 0.0
    %1572 = vmatpush1.msra.mxu0 %v881
    %1573 = vmatprep.subr.mxu0 0.0
    %1574 = vmatpush1.msra.mxu0 %v882
    %1575 = vmatprep.subr.mxu0 0.0
    %1576 = vmatpush1.msra.mxu0 %v883
    %1577 = vmatprep.subr.mxu0 0.0
    %1578 = vmatpush1.msra.mxu0 %v884
    %1579 = vmatprep.subr.mxu0 0.0
    %1580 = vmatpush1.msra.mxu0 %v885
    %1581 = vmatprep.subr.mxu0 0.0
    %1582 = vmatpush1.msra.mxu0 %v886
    %1583 = vmatprep.subr.mxu0 0.0
    %1584 = vmatpush1.msra.mxu0 %v887
    %1585 = vmatprep.subr.mxu0 0.0
    %1586 = vmatpush1.msra.mxu0 %v888
    %1587 = vmatprep.subr.mxu0 0.0
    %1588 = vmatpush1.msra.mxu0 %v889
    %1589 = vmatprep.mubr.f32.mxu0 %v1522
    %1590 = vmatmul.mubr.f32.gmra.mrb[0].mxu0 %v1521
    %v1591 = vpop.f32.mrb[0].mxu0
    %v1592 = vadd.f32 0.0, %v1591
    %v1593 = vpop.f32.mrb[0].mxu0
    %1594 = vdwg.mxu0
    %v1595 = vadd.f32 %v1520, %v1592
    %v1596 = vrot.slane %v209, 7
    %v1597 = vrot.slane %v210, 7
    %1600 = vmatprep.subr.mxu0 0.0
    %1601 = vmatpush1.msra.mxu0 %v966
    %1602 = vmatprep.subr.mxu0 0.0
    %1603 = vmatpush1.msra.mxu0 %v967
    %1604 = vmatprep.subr.mxu0 0.0
    %1605 = vmatpush1.msra.mxu0 %v968
    %1606 = vmatprep.subr.mxu0 0.0
    %1607 = vmatpush1.msra.mxu0 %v969
    %1608 = vmatprep.subr.mxu0 0.0
    %1609 = vmatpush1.msra.mxu0 %v970
    %1610 = vmatprep.subr.mxu0 0.0
    %1611 = vmatpush1.msra.mxu0 %v971
    %1612 = vmatprep.subr.mxu0 0.0
    %1613 = vmatpush1.msra.mxu0 %v972
    %1614 = vmatprep.subr.mxu0 0.0
    %1615 = vmatpush1.msra.mxu0 %v973
    %1616 = vmatprep.subr.mxu0 0.0
    %1617 = vmatpush1.msra.mxu0 %v974
    %1618 = vmatprep.subr.mxu0 0.0
    %1619 = vmatpush1.msra.mxu0 %v975
    %1620 = vmatprep.subr.mxu0 0.0
    %1621 = vmatpush1.msra.mxu0 %v976
    %1622 = vmatprep.subr.mxu0 0.0
    %1623 = vmatpush1.msra.mxu0 %v977
    %1624 = vmatprep.subr.mxu0 0.0
    %1625 = vmatpush1.msra.mxu0 %v978
    %1626 = vmatprep.subr.mxu0 0.0
    %1627 = vmatpush1.msra.mxu0 %v979
    %1628 = vmatprep.subr.mxu0 0.0
    %1629 = vmatpush1.msra.mxu0 %v980
    %1630 = vmatprep.subr.mxu0 0.0
    %1631 = vmatpush1.msra.mxu0 %v981
    %1632 = vmatprep.subr.mxu0 0.0
    %1633 = vmatpush1.msra.mxu0 %v982
    %1634 = vmatprep.subr.mxu0 0.0
    %1635 = vmatpush1.msra.mxu0 %v983
    %1636 = vmatprep.subr.mxu0 0.0
    %1637 = vmatpush1.msra.mxu0 %v984
    %1638 = vmatprep.subr.mxu0 0.0
    %1639 = vmatpush1.msra.mxu0 %v985
    %1640 = vmatprep.subr.mxu0 0.0
    %1641 = vmatpush1.msra.mxu0 %v986
    %1642 = vmatprep.subr.mxu0 0.0
    %1643 = vmatpush1.msra.mxu0 %v987
    %1644 = vmatprep.subr.mxu0 0.0
    %1645 = vmatpush1.msra.mxu0 %v988
    %1646 = vmatprep.subr.mxu0 0.0
    %1647 = vmatpush1.msra.mxu0 %v989
    %1648 = vmatprep.subr.mxu0 0.0
    %1649 = vmatpush1.msra.mxu0 %v990
    %1650 = vmatprep.subr.mxu0 0.0
    %1651 = vmatpush1.msra.mxu0 %v991
    %1652 = vmatprep.subr.mxu0 0.0
    %1653 = vmatpush1.msra.mxu0 %v992
    %1654 = vmatprep.subr.mxu0 0.0
    %1655 = vmatpush1.msra.mxu0 %v993
    %1656 = vmatprep.subr.mxu0 0.0
    %1657 = vmatpush1.msra.mxu0 %v994
    %1658 = vmatprep.subr.mxu0 0.0
    %1659 = vmatpush1.msra.mxu0 %v995
    %1660 = vmatprep.subr.mxu0 0.0
    %1661 = vmatpush1.msra.mxu0 %v996
    %1662 = vmatprep.subr.mxu0 0.0
    %1663 = vmatpush1.msra.mxu0 %v997
    %1664 = vmatprep.mubr.f32.mxu0 %v1597
    %1665 = vmatmul.mubr.f32.gmra.mrb[0].mxu0 %v1596
    %v1666 = vpop.f32.mrb[0].mxu0
    %v1667 = vadd.f32 0.0, %v1666
    %v1668 = vpop.f32.mrb[0].mxu0
    %1669 = vdwg.mxu0
    %v1670 = vadd.f32 %v1595, %v1667
    %v1672 = vlaneseq
    %v1673 = vshrl.u32 %v1672, 7
    %v1674 = vsub.s32 0, %v1673
    %v1675 = vrot.slane %v1670, %v1674
    %vm1677 = vcmask 1040384
    %v1678 = vsel %vm1677, %v1072, %v1675
    %1679 = vst [vmem:[#allocation2] sm:$0x3] %v1678
    // Predicated region
    $region22: #{forward.1} parent=1 // pred_check
      _
    $region23: #{forward.1} parent=1 // pred_check_branch
      %1681 = sbr.rel (0) target = $region25
    $region24: #{forward.1} parent=1 // pred_region
      %s1683 = ssub.s32 32, 32
      %1684 = vsyncadd [#allocation3], %s1683
      %s1686 = sshll.u32 [#allocation2], 4
      %s1687 = int_to_ptr.vmem [resolvable:$true] %s1686
      %1689 = dma.vmem_to_hbm [thread:$0]  %s1687, 32, %s5, [#allocation3]
    $region25: #{forward.1} parent=1 // pred_fallthru
      _
    // Predicated region
    $region26: #{forward.1} parent=1 // pred_check
      _
    $region27: #{forward.1} parent=1 // pred_check_branch
      %1691 = sbr.rel (0) target = $region29
    $region28: #{forward.1} parent=1 // pred_region
      %1692 = dma.done [#allocation3], 32
    $region29: #{forward.1} parent=1 // pred_fallthru
      _
    %1693 = vsyncpa [#allocation3], 1

</llo_original>
